<compile_context>
chip_gen: v7x
topology: tpu7x:2x2x1
jax: 0.10.0
libtpu: 0.0.40
codegen_flags: <defaults>
</compile_context>

<pallas_src>
import jax
import jax.numpy as jnp
from jax.experimental import pallas as pl
from jax.experimental.pallas import tpu as pltpu

FP = 128  # lane-dense feature padding


# ------------------------------ helpers --------------------------------------

def _round_up(x, m):
    return ((x + m - 1) // m) * m


def _pad2(x, rows, cols):
    """Zero-pad a 2-D array to (rows, cols)."""
    return jnp.zeros((rows, cols), x.dtype).at[: x.shape[0], : x.shape[1]].set(x)


def _incoming(node_types, edge_types):
    return {nt: tuple(et for et in edge_types if et[2] == nt) for nt in node_types}


# ----------------------------- Pallas kernel ----------------------------------

def _make_fused_mpn_kernel(node_types, edge_types, num_layers, npad):
    """Whole-forward fused kernel operating on 4 packed input slabs + 1 output slab.

    Slab layouts (all row offsets are static Python ints baked into the kernel):
      a_ref: (|E| * npad, npad)            stacked dense adjacencies A[dst, src]
      x_ref: (|V| * npad, FP)              stacked input node features
      w_ref: (sum_{l,dst} FP*(inc+1), FP)  per-(layer, dst) fused weight
                                           [WrelT_et ...; sum_et WrootT_et]
      b_ref: (L * |V| * npad, FP)          pre-summed, pre-broadcast biases
      o_ref: (|V| * npad, FP)              stacked outputs
    """
    incoming = _incoming(node_types, edge_types)
    n_nt = len(node_types)

    a_off = {et: i * npad for i, et in enumerate(edge_types)}
    x_off = {nt: i * npad for i, nt in enumerate(node_types)}
    w_off = {}
    r = 0
    for li in range(num_layers):
        for nt in node_types:
            w_off[(li, nt)] = r
            r += FP * (len(incoming[nt]) + 1)
    b_off = {(li, nt): (li * n_nt + i) * npad
             for li in range(num_layers) for i, nt in enumerate(node_types)}
    out_off = dict(x_off)

    def kernel(a_ref, x_ref, w_ref, b_ref, o_ref):
        # Load adjacency + input features once; intermediates never leave VMEM/vregs.
        A = {et: a_ref[pl.ds(a_off[et], npad), :] for et in edge_types}
        h = {nt: x_ref[pl.ds(x_off[nt], npad), :] for nt in node_types}

        for li in range(num_layers):
            new_h = {}
            for dst in node_types:
                ninc = len(incoming[dst])
                # Messages per incoming edge type, then one fused larger-K matmul:
                #   concat([A_et @ h_src ..., h_dst]) @ [WrelT_et ...; WrootT_dst_sum]
                parts = [jnp.dot(A[et], h[et[0]], preferred_element_type=jnp.float32)
                         for et in incoming[dst]]
                parts.append(h[dst])                              # root-term activation
                stacked = jnp.concatenate(parts, axis=-1)         # (npad, FP*(ninc+1))
                w = w_ref[pl.ds(w_off[(li, dst)], FP * (ninc + 1)), :]
                acc = jnp.dot(stacked, w, preferred_element_type=jnp.float32)
                acc = acc + b_ref[pl.ds(b_off[(li, dst)], npad), :]
                if li < num_layers - 1:
                    acc = jnp.maximum(acc, 0.0)
                new_h[dst] = acc
            h = new_h

        for nt in node_types:
            o_ref[pl.ds(out_off[nt], npad), :] = h[nt].astype(o_ref.dtype)

    return kernel


# -------------------------- one-time weight packing ----------------------------

def pack_weights(params, node_types, edge_types, npad):
    """One-time packing (hoisted out of the forward): pad to 128 lanes, pre-sum root
    weights / biases per dst, stack each (layer, dst)'s relation + root weights along
    the contraction axis, pre-broadcast biases to the row-tile height, and
    concatenate everything into two lane-dense slabs."""
    incoming = _incoming(node_types, edge_types)
    w_blocks, b_blocks = [], []
    for lp in params:
        for dst in node_types:
            ets = incoming[dst]
            blocks = [_pad2(lp[et][0], FP, FP) for et in ets]       # WrelT per incoming et
            wroot_sum = lp[ets[0]][1]
            b_sum = lp[ets[0]][2]
            for et in ets[1:]:
                wroot_sum = wroot_sum + lp[et][1]
                b_sum = b_sum + lp[et][2]
            blocks.append(_pad2(wroot_sum, FP, FP))                 # pre-summed WrootT
            w_blocks.append(jnp.concatenate(blocks, axis=0))
            b_blocks.append(jnp.broadcast_to(_pad2(b_sum, 1, FP), (npad, FP)))
    return jnp.concatenate(w_blocks, axis=0), jnp.concatenate(b_blocks, axis=0)


# ------------------------------ forward builder --------------------------------

def build_mpn_hetero_forward(node_types, edge_types, num_layers, n_per_type,
                             out_channels):
    incoming = _incoming(node_types, edge_types)
    for nt in node_types:
        if not incoming[nt]:
            raise ValueError(
                f"node type {nt!r} has no incoming edge types; to_hetero(aggr='sum') "
                f"produces no output for it — handle it outside the kernel.")
    npad = max(8, _round_up(max(n_per_type[nt] for nt in node_types), 8))
    n_nt, n_et = len(node_types), len(edge_types)

    kernel = _make_fused_mpn_kernel(node_types, edge_types, num_layers, npad)
    vmem = pl.BlockSpec(memory_space=pltpu.MemorySpace.VMEM)
    call = pl.pallas_call(
        kernel,
        out_shape=jax.ShapeDtypeStruct((n_nt * npad, FP), jnp.float32),
        in_specs=[vmem, vmem, vmem, vmem],
        out_specs=vmem,
    )

    @jax.jit
    def forward(x_list, adj_list, w_slab, b_slab):
        # Only the data-dependent padding/stacking happens per call (fused by XLA jit).
        a_slab = jnp.concatenate(
            [_pad2(a.astype(jnp.float32), npad, npad) for a in adj_list], axis=0)
        x_slab = jnp.concatenate(
            [_pad2(x.astype(jnp.float32), npad, FP) for x in x_list], axis=0)
        out = call(a_slab, x_slab, w_slab, b_slab)
        return tuple(out[i * npad: i * npad + n_per_type[nt], :out_channels]
                     for i, nt in enumerate(node_types))

    return forward, npad


# ------------------------------- parameters -----------------------------------

def init_params(key, node_types, edge_types, f_in, hidden, out_channels, num_layers):
    """Deterministic synthetic weights; shapes mirror to_hetero(MPN(GraphConv))."""
    layer_in = dict(f_in)
    params = []
    for li in range(num_layers):
        fout = hidden if li < num_layers - 1 else out_channels
        lp = {}
        for et in edge_types:
            src, _, dst = et
            key, k1, k2, k3 = jax.random.split(key, 4)
            wrel = 0.1 * jax.random.normal(k1, (fout, layer_in[src]), jnp.float32)   # lin_rel.weight
            wroot = 0.1 * jax.random.normal(k2, (fout, layer_in[dst]), jnp.float32)  # lin_root.weight
            bias = 0.1 * jax.random.normal(k3, (fout,), jnp.float32)                 # lin_rel.bias
            lp[et] = (wrel.T, wroot.T, bias.reshape(1, fout))
        params.append(lp)
        layer_in = {nt: fout for nt in node_types}
    return params


# ----------------------------- pure-JAX reference ------------------------------

def ref_forward(x_dict, adj_dict, params, node_types, edge_types):
    h = dict(x_dict)
    L = len(params)
    for li, lp in enumerate(params):
        new_h = {}
        for dst in node_types:
            acc = None
            for et in edge_types:
                if et[2] != dst:
                    continue
                src = et[0]
                wrel_t, wroot_t, b = lp[et]
                y = (adj_dict[et] @ h[src]) @ wrel_t + h[dst] @ wroot_t + b
                acc = y if acc is None else acc + y
            if li < L - 1:
                acc = jnp.maximum(acc, 0.0)
            new_h[dst] = acc
        h = new_h
    return h


# ----------------------------------- main --------------------------------------

if __name__ == "__main__":
    key = jax.random.PRNGKey(0)

    # metadata = (node_types, edge_types), as PyG's to_hetero expects.
    node_types = ("a", "b")
    edge_types = (("a", "to", "a"), ("a", "to", "b"), ("b", "to", "a"))

    N = {"a": 8, "b": 8}          # nodes per type
    F_in = {"a": 6, "b": 4}       # lazy (-1) input dims per node type
    hidden_channels = 32
    num_mpn_layers = 3            # first: F_in -> hidden, mid: hidden -> hidden, last: hidden -> 2
    out_channels = 2
    num_edges = 16

    # node features
    key, kxa, kxb = jax.random.split(key, 3)
    x_dict = {
        "a": jax.random.normal(kxa, (N["a"], F_in["a"]), jnp.float32),
        "b": jax.random.normal(kxb, (N["b"], F_in["b"]), jnp.float32),
    }

    # edge_index per edge type -> dense adjacency A[dst, src] (glue; sum-aggr == A @ X_src)
    adj_dict = {}
    for et in edge_types:
        src, _, dst = et
        key, ks, kd = jax.random.split(key, 3)
        src_idx = jax.random.randint(ks, (num_edges,), 0, N[src])
        dst_idx = jax.random.randint(kd, (num_edges,), 0, N[dst])
        adj_dict[et] = jnp.zeros((N[dst], N[src]), jnp.float32).at[dst_idx, src_idx].add(1.0)

    params = init_params(key, node_types, edge_types, F_in,
                         hidden_channels, out_channels, num_mpn_layers)

    # Build once (kernel + jitted wrapper), pack weights once.
    forward, npad = build_mpn_hetero_forward(node_types, edge_types, num_mpn_layers,
                                             N, out_channels)
    w_slab, b_slab = pack_weights(params, node_types, edge_types, npad)

    x_list = tuple(x_dict[nt] for nt in node_types)
    adj_list = tuple(adj_dict[et] for et in edge_types)

    outs = forward(x_list, adj_list, w_slab, b_slab)
    outs = jax.block_until_ready(outs)
    out_dict = {nt: outs[i] for i, nt in enumerate(node_types)}

    ref_dict = ref_forward(x_dict, adj_dict, params, node_types, edge_types)
    for nt in node_types:
        assert out_dict[nt].shape == (N[nt], out_channels)
        assert jnp.allclose(out_dict[nt], ref_dict[nt], atol=1e-4, rtol=1e-4), nt

    print("KERNEL_OK")
</pallas_src>

<mosaic_0001>
module attributes {stable_mosaic.version = 11 : i64} {
  func.func @kernel(%arg0: memref<24x8xf32, #tpu.memory_space<vmem>>, %arg1: memref<16x128xf32, #tpu.memory_space<vmem>>, %arg2: memref<1920x128xf32, #tpu.memory_space<vmem>>, %arg3: memref<48x128xf32, #tpu.memory_space<vmem>>, %arg4: memref<16x128xf32, #tpu.memory_space<vmem>>) attributes {dimension_semantics = [], scalar_prefetch = 0 : i64, scratch_operands = 0 : i64, tpu.core_type = #tpu.core_type<tc>} {
    %c0 = arith.constant 0 : index
    %c0_0 = arith.constant 0 : index
    %0 = vector.load %arg0[%c0, %c0_0] : memref<24x8xf32, #tpu.memory_space<vmem>>, vector<8x8xf32>
    %c8 = arith.constant 8 : index
    %c0_1 = arith.constant 0 : index
    %1 = vector.load %arg0[%c8, %c0_1] : memref<24x8xf32, #tpu.memory_space<vmem>>, vector<8x8xf32>
    %c16 = arith.constant 16 : index
    %c0_2 = arith.constant 0 : index
    %2 = vector.load %arg0[%c16, %c0_2] : memref<24x8xf32, #tpu.memory_space<vmem>>, vector<8x8xf32>
    %c0_3 = arith.constant 0 : index
    %c0_4 = arith.constant 0 : index
    %3 = vector.load %arg1[%c0_3, %c0_4] : memref<16x128xf32, #tpu.memory_space<vmem>>, vector<8x128xf32>
    %c8_5 = arith.constant 8 : index
    %c0_6 = arith.constant 0 : index
    %4 = vector.load %arg1[%c8_5, %c0_6] : memref<16x128xf32, #tpu.memory_space<vmem>>, vector<8x128xf32>
    %cst = arith.constant dense<0.000000e+00> : vector<8x128xf32>
    %5 = tpu.matmul %0, %3, %cst {dimension_numbers = #tpu.dot_dimension_numbers<[1], [0], [0], [1], [0, 0, 1, 1], [], []>} : vector<8x8xf32>, vector<8x128xf32>, vector<8x128xf32> -> vector<8x128xf32>
    %cst_7 = arith.constant dense<0.000000e+00> : vector<8x128xf32>
    %6 = tpu.matmul %2, %4, %cst_7 {dimension_numbers = #tpu.dot_dimension_numbers<[1], [0], [0], [1], [0, 0, 1, 1], [], []>} : vector<8x8xf32>, vector<8x128xf32>, vector<8x128xf32> -> vector<8x128xf32>
    %7 = tpu.concatenate %5, %6, %3 in 1 : vector<8x128xf32>, vector<8x128xf32>, vector<8x128xf32> -> vector<8x384xf32>
    %c0_8 = arith.constant 0 : index
    %c0_9 = arith.constant 0 : index
    %8 = vector.load %arg2[%c0_8, %c0_9] : memref<1920x128xf32, #tpu.memory_space<vmem>>, vector<384x128xf32>
    %cst_10 = arith.constant dense<0.000000e+00> : vector<8x128xf32>
    %9 = tpu.matmul %7, %8, %cst_10 {dimension_numbers = #tpu.dot_dimension_numbers<[1], [0], [0], [1], [0, 0, 1, 1], [], []>} : vector<8x384xf32>, vector<384x128xf32>, vector<8x128xf32> -> vector<8x128xf32>
    %c0_11 = arith.constant 0 : index
    %c0_12 = arith.constant 0 : index
    %10 = vector.load %arg3[%c0_11, %c0_12] : memref<48x128xf32, #tpu.memory_space<vmem>>, vector<8x128xf32>
    %11 = arith.addf %9, %10 : vector<8x128xf32>
    %cst_13 = arith.constant 0.000000e+00 : f32
    %12 = vector.broadcast %cst_13 : f32 to vector<8x128xf32>
    %13 = arith.maximumf %11, %12 : vector<8x128xf32>
    %cst_14 = arith.constant dense<0.000000e+00> : vector<8x128xf32>
    %14 = tpu.matmul %1, %3, %cst_14 {dimension_numbers = #tpu.dot_dimension_numbers<[1], [0], [0], [1], [0, 0, 1, 1], [], []>} : vector<8x8xf32>, vector<8x128xf32>, vector<8x128xf32> -> vector<8x128xf32>
    %15 = tpu.concatenate %14, %4 in 1 : vector<8x128xf32>, vector<8x128xf32> -> vector<8x256xf32>
    %c384 = arith.constant 384 : index
    %c0_15 = arith.constant 0 : index
    %16 = vector.load %arg2[%c384, %c0_15] : memref<1920x128xf32, #tpu.memory_space<vmem>>, vector<256x128xf32>
    %cst_16 = arith.constant dense<0.000000e+00> : vector<8x128xf32>
    %17 = tpu.matmul %15, %16, %cst_16 {dimension_numbers = #tpu.dot_dimension_numbers<[1], [0], [0], [1], [0, 0, 1, 1], [], []>} : vector<8x256xf32>, vector<256x128xf32>, vector<8x128xf32> -> vector<8x128xf32>
    %c8_17 = arith.constant 8 : index
    %c0_18 = arith.constant 0 : index
    %18 = vector.load %arg3[%c8_17, %c0_18] : memref<48x128xf32, #tpu.memory_space<vmem>>, vector<8x128xf32>
    %19 = arith.addf %17, %18 : vector<8x128xf32>
    %cst_19 = arith.constant 0.000000e+00 : f32
    %20 = vector.broadcast %cst_19 : f32 to vector<8x128xf32>
    %21 = arith.maximumf %19, %20 : vector<8x128xf32>
    %cst_20 = arith.constant dense<0.000000e+00> : vector<8x128xf32>
    %22 = tpu.matmul %0, %13, %cst_20 {dimension_numbers = #tpu.dot_dimension_numbers<[1], [0], [0], [1], [0, 0, 1, 1], [], []>} : vector<8x8xf32>, vector<8x128xf32>, vector<8x128xf32> -> vector<8x128xf32>
    %cst_21 = arith.constant dense<0.000000e+00> : vector<8x128xf32>
    %23 = tpu.matmul %2, %21, %cst_21 {dimension_numbers = #tpu.dot_dimension_numbers<[1], [0], [0], [1], [0, 0, 1, 1], [], []>} : vector<8x8xf32>, vector<8x128xf32>, vector<8x128xf32> -> vector<8x128xf32>
    %24 = tpu.concatenate %22, %23, %13 in 1 : vector<8x128xf32>, vector<8x128xf32>, vector<8x128xf32> -> vector<8x384xf32>
    %c640 = arith.constant 640 : index
    %c0_22 = arith.constant 0 : index
    %25 = vector.load %arg2[%c640, %c0_22] : memref<1920x128xf32, #tpu.memory_space<vmem>>, vector<384x128xf32>
    %cst_23 = arith.constant dense<0.000000e+00> : vector<8x128xf32>
    %26 = tpu.matmul %24, %25, %cst_23 {dimension_numbers = #tpu.dot_dimension_numbers<[1], [0], [0], [1], [0, 0, 1, 1], [], []>} : vector<8x384xf32>, vector<384x128xf32>, vector<8x128xf32> -> vector<8x128xf32>
    %c16_24 = arith.constant 16 : index
    %c0_25 = arith.constant 0 : index
    %27 = vector.load %arg3[%c16_24, %c0_25] : memref<48x128xf32, #tpu.memory_space<vmem>>, vector<8x128xf32>
    %28 = arith.addf %26, %27 : vector<8x128xf32>
    %cst_26 = arith.constant 0.000000e+00 : f32
    %29 = vector.broadcast %cst_26 : f32 to vector<8x128xf32>
    %30 = arith.maximumf %28, %29 : vector<8x128xf32>
    %cst_27 = arith.constant dense<0.000000e+00> : vector<8x128xf32>
    %31 = tpu.matmul %1, %13, %cst_27 {dimension_numbers = #tpu.dot_dimension_numbers<[1], [0], [0], [1], [0, 0, 1, 1], [], []>} : vector<8x8xf32>, vector<8x128xf32>, vector<8x128xf32> -> vector<8x128xf32>
    %32 = tpu.concatenate %31, %21 in 1 : vector<8x128xf32>, vector<8x128xf32> -> vector<8x256xf32>
    %c1024 = arith.constant 1024 : index
    %c0_28 = arith.constant 0 : index
    %33 = vector.load %arg2[%c1024, %c0_28] : memref<1920x128xf32, #tpu.memory_space<vmem>>, vector<256x128xf32>
    %cst_29 = arith.constant dense<0.000000e+00> : vector<8x128xf32>
    %34 = tpu.matmul %32, %33, %cst_29 {dimension_numbers = #tpu.dot_dimension_numbers<[1], [0], [0], [1], [0, 0, 1, 1], [], []>} : vector<8x256xf32>, vector<256x128xf32>, vector<8x128xf32> -> vector<8x128xf32>
    %c24 = arith.constant 24 : index
    %c0_30 = arith.constant 0 : index
    %35 = vector.load %arg3[%c24, %c0_30] : memref<48x128xf32, #tpu.memory_space<vmem>>, vector<8x128xf32>
    %36 = arith.addf %34, %35 : vector<8x128xf32>
    %cst_31 = arith.constant 0.000000e+00 : f32
    %37 = vector.broadcast %cst_31 : f32 to vector<8x128xf32>
    %38 = arith.maximumf %36, %37 : vector<8x128xf32>
    %cst_32 = arith.constant dense<0.000000e+00> : vector<8x128xf32>
    %39 = tpu.matmul %0, %30, %cst_32 {dimension_numbers = #tpu.dot_dimension_numbers<[1], [0], [0], [1], [0, 0, 1, 1], [], []>} : vector<8x8xf32>, vector<8x128xf32>, vector<8x128xf32> -> vector<8x128xf32>
    %cst_33 = arith.constant dense<0.000000e+00> : vector<8x128xf32>
    %40 = tpu.matmul %2, %38, %cst_33 {dimension_numbers = #tpu.dot_dimension_numbers<[1], [0], [0], [1], [0, 0, 1, 1], [], []>} : vector<8x8xf32>, vector<8x128xf32>, vector<8x128xf32> -> vector<8x128xf32>
    %41 = tpu.concatenate %39, %40, %30 in 1 : vector<8x128xf32>, vector<8x128xf32>, vector<8x128xf32> -> vector<8x384xf32>
    %c1280 = arith.constant 1280 : index
    %c0_34 = arith.constant 0 : index
    %42 = vector.load %arg2[%c1280, %c0_34] : memref<1920x128xf32, #tpu.memory_space<vmem>>, vector<384x128xf32>
    %cst_35 = arith.constant dense<0.000000e+00> : vector<8x128xf32>
    %43 = tpu.matmul %41, %42, %cst_35 {dimension_numbers = #tpu.dot_dimension_numbers<[1], [0], [0], [1], [0, 0, 1, 1], [], []>} : vector<8x384xf32>, vector<384x128xf32>, vector<8x128xf32> -> vector<8x128xf32>
    %c32 = arith.constant 32 : index
    %c0_36 = arith.constant 0 : index
    %44 = vector.load %arg3[%c32, %c0_36] : memref<48x128xf32, #tpu.memory_space<vmem>>, vector<8x128xf32>
    %45 = arith.addf %43, %44 : vector<8x128xf32>
    %cst_37 = arith.constant dense<0.000000e+00> : vector<8x128xf32>
    %46 = tpu.matmul %1, %30, %cst_37 {dimension_numbers = #tpu.dot_dimension_numbers<[1], [0], [0], [1], [0, 0, 1, 1], [], []>} : vector<8x8xf32>, vector<8x128xf32>, vector<8x128xf32> -> vector<8x128xf32>
    %47 = tpu.concatenate %46, %38 in 1 : vector<8x128xf32>, vector<8x128xf32> -> vector<8x256xf32>
    %c1664 = arith.constant 1664 : index
    %c0_38 = arith.constant 0 : index
    %48 = vector.load %arg2[%c1664, %c0_38] : memref<1920x128xf32, #tpu.memory_space<vmem>>, vector<256x128xf32>
    %cst_39 = arith.constant dense<0.000000e+00> : vector<8x128xf32>
    %49 = tpu.matmul %47, %48, %cst_39 {dimension_numbers = #tpu.dot_dimension_numbers<[1], [0], [0], [1], [0, 0, 1, 1], [], []>} : vector<8x256xf32>, vector<256x128xf32>, vector<8x128xf32> -> vector<8x128xf32>
    %c40 = arith.constant 40 : index
    %c0_40 = arith.constant 0 : index
    %50 = vector.load %arg3[%c40, %c0_40] : memref<48x128xf32, #tpu.memory_space<vmem>>, vector<8x128xf32>
    %51 = arith.addf %49, %50 : vector<8x128xf32>
    %c0_41 = arith.constant 0 : index
    %c0_42 = arith.constant 0 : index
    %52 = vector.load %arg4[%c0_41, %c0_42] : memref<16x128xf32, #tpu.memory_space<vmem>>, vector<8x128xf32>
    tpu.vector_store %arg4[%c0_41, %c0_42], %45 {strides = array<i32>} : memref<16x128xf32, #tpu.memory_space<vmem>>, vector<8x128xf32>,
    %c8_43 = arith.constant 8 : index
    %c0_44 = arith.constant 0 : index
    %53 = vector.load %arg4[%c8_43, %c0_44] : memref<16x128xf32, #tpu.memory_space<vmem>>, vector<8x128xf32>
    tpu.vector_store %arg4[%c8_43, %c0_44], %51 {strides = array<i32>} : memref<16x128xf32, #tpu.memory_space<vmem>>, vector<8x128xf32>,
    return
  }
}

</mosaic_0001>

<llo_original>
// kernel: forward.1
$region0: #{forward.1}
  #allocation0 [shape = 'u32[]', space=smem, size = 0x4, offset = 0x4, fixed_abs, tag = 'smem constant byte address 0x4 - core index']
  #allocation1 [shape = 'u32[144,128]{1,0:T(1,128)}', space=vmem, size = 0x12000, scoped, tag = 'internal scratch']
  %s0 = inlined_call_operand.vmem [shape: f32[24,8], index: 0, kind: input, shape index: {}]
  %s1 = inlined_call_operand.vmem [shape: f32[16,128], index: 1, kind: input, shape index: {}]
  %s2 = inlined_call_operand.hbm [shape: f32[1920,128], index: 2, kind: input, shape index: {}]
  %s3 = inlined_call_operand.vmem [shape: f32[48,128], index: 3, kind: input, shape index: {}]
  %s4 = inlined_call_operand.vmem [shape: f32[16,128], index: 4, kind: output, shape index: {}]
  %s5 = sld [smem:[#allocation0]]
  $region30: #{forward.1} parent=0
    _
  %s7 = ssub.s32 1, %s5
  %s8 = scalar_select 0, %s7, %s5
  $region1: #{forward.1} parent=0
    #allocation2 [shape = 'u8[983040]{0}', space=vmem, size = 0xf0000, scoped, tag = 'input window, operand 2, single buffered']
    #allocation3 [shape = 's32[1]{0}', space=sflag, size = 0x4, scoped, tag = 'scoped memory for forward.1']
    %9 = vsyncpa [#allocation3], 0
    // Predicated region
    $region2: #{forward.1} parent=1 // pred_check
      _
    $region3: #{forward.1} parent=1 // pred_check_branch
      %11 = sbr.rel (0) target = $region5
    $region4: #{forward.1} parent=1 // pred_region
      _
    $region5: #{forward.1} parent=1 // pred_fallthru
      _
    // Predicated region
    $region6: #{forward.1} parent=1 // pred_check
      _
    $region7: #{forward.1} parent=1 // pred_check_branch
      %13 = sbr.rel (0) target = $region9
    $region8: #{forward.1} parent=1 // pred_region
      _
    $region9: #{forward.1} parent=1 // pred_fallthru
      _
    // Predicated region
    $region10: #{forward.1} parent=1 // pred_check
      _
    $region11: #{forward.1} parent=1 // pred_check_branch
      %15 = sbr.rel (0) target = $region13
    $region12: #{forward.1} parent=1 // pred_region
      %s17 = ssub.s32 30720, 30720
      %18 = vsyncadd [#allocation3], %s17
      %s19 = sshll.u32 [#allocation2], 4
      %s20 = int_to_ptr.vmem [resolvable:$true] %s19
      %25 = dma.hbm_to_vmem [thread:$0]  %s2, 30720, %s20, [#allocation3], 128, 128, 8
    $region13: #{forward.1} parent=1 // pred_fallthru
      _
    // Predicated region
    $region14: #{forward.1} parent=1 // pred_check
      _
    $region15: #{forward.1} parent=1 // pred_check_branch
      %27 = sbr.rel (0) target = $region17
    $region16: #{forward.1} parent=1 // pred_region
      _
    $region17: #{forward.1} parent=1 // pred_fallthru
      _
    // Predicated region
    $region18: #{forward.1} parent=1 // pred_check
      _
    $region19: #{forward.1} parent=1 // pred_check_branch
      %29 = sbr.rel (0) target = $region21
    $region20: #{forward.1} parent=1 // pred_region
      %30 = dma.done [#allocation3], 30720
    $region21: #{forward.1} parent=1 // pred_fallthru
      _
    %v31 = vld [vmem:[%s0] sm:$0xff]
    %v32 = vld [vmem:[%s0 + $0x8] sm:$0xff]
    %v33 = vld [vmem:[%s0 + $0x10] sm:$0xff]
    %v34 = vld [vmem:[%s1] sm:$0xff]
    %v35 = vld [vmem:[%s1 + $0x8] sm:$0xff]
    %vm36 = vcmask 64512
    %v38 = vsel %vm36, %v31, 0
    %40 = vmatprep.subr.mxu0 0.0
    %41 = vmatpush1.msra.mxu0 %v34
    %42 = vmatprep.subr.mxu0 0.0
    %43 = vmatpush1.msra.mxu0 0.0
    %44 = vmatprep.subr.mxu0 0.0
    %45 = vmatpush1.msra.mxu0 0.0
    %46 = vmatprep.subr.mxu0 0.0
    %47 = vmatpush1.msra.mxu0 0.0
    %48 = vmatprep.subr.mxu0 0.0
    %49 = vmatpush1.msra.mxu0 0.0
    %50 = vmatprep.subr.mxu0 0.0
    %51 = vmatpush1.msra.mxu0 0.0
    %52 = vmatprep.subr.mxu0 0.0
    %53 = vmatpush1.msra.mxu0 0.0
    %54 = vmatprep.subr.mxu0 0.0
    %55 = vmatpush1.msra.mxu0 0.0
    %56 = vmatprep.subr.mxu0 0.0
    %57 = vmatpush1.msra.mxu0 0.0
    %58 = vmatprep.subr.mxu0 0.0
    %59 = vmatpush1.msra.mxu0 0.0
    %60 = vmatprep.subr.mxu0 0.0
    %61 = vmatpush1.msra.mxu0 0.0
    %62 = vmatprep.subr.mxu0 0.0
    %63 = vmatpush1.msra.mxu0 0.0
    %64 = vmatprep.subr.mxu0 0.0
    %65 = vmatpush1.msra.mxu0 0.0
    %66 = vmatprep.subr.mxu0 0.0
    %67 = vmatpush1.msra.mxu0 0.0
    %68 = vmatprep.subr.mxu0 0.0
    %69 = vmatpush1.msra.mxu0 0.0
    %70 = vmatprep.subr.mxu0 0.0
    %71 = vmatpush1.msra.mxu0 0.0
    %72 = vmatprep.subr.mxu0 0.0
    %73 = vmatpush1.msra.mxu0 0.0
    %74 = vmatprep.subr.mxu0 0.0
    %75 = vmatpush1.msra.mxu0 0.0
    %76 = vmatprep.subr.mxu0 0.0
    %77 = vmatpush1.msra.mxu0 0.0
    %78 = vmatprep.subr.mxu0 0.0
    %79 = vmatpush1.msra.mxu0 0.0
    %80 = vmatprep.subr.mxu0 0.0
    %81 = vmatpush1.msra.mxu0 0.0
    %82 = vmatprep.subr.mxu0 0.0
    %83 = vmatpush1.msra.mxu0 0.0
    %84 = vmatprep.subr.mxu0 0.0
    %85 = vmatpush1.msra.mxu0 0.0
    %86 = vmatprep.subr.mxu0 0.0
    %87 = vmatpush1.msra.mxu0 0.0
    %88 = vmatprep.subr.mxu0 0.0
    %89 = vmatpush1.msra.mxu0 0.0
    %90 = vmatprep.subr.mxu0 0.0
    %91 = vmatpush1.msra.mxu0 0.0
    %92 = vmatprep.subr.mxu0 0.0
    %93 = vmatpush1.msra.mxu0 0.0
    %94 = vmatprep.subr.mxu0 0.0
    %95 = vmatpush1.msra.mxu0 0.0
    %96 = vmatprep.subr.mxu0 0.0
    %97 = vmatpush1.msra.mxu0 0.0
    %98 = vmatprep.subr.mxu0 0.0
    %99 = vmatpush1.msra.mxu0 0.0
    %100 = vmatprep.subr.mxu0 0.0
    %101 = vmatpush1.msra.mxu0 0.0
    %102 = vmatprep.subr.mxu0 0.0
    %103 = vmatpush1.msra.mxu0 0.0
    %104 = vmatprep.mubr.f32.mxu0 0.0
    %105 = vmatmul.mubr.f32.gmra.mrb[0].mxu0 %v38
    %v106 = vpop.f32.mrb[0].mxu0
    %v107 = vadd.f32 0.0, %v106
    %v108 = vpop.f32.mrb[0].mxu0
    %109 = vdwg.mxu0
    %v111 = vsel %vm36, %v33, 0
    %113 = vmatprep.subr.mxu0 0.0
    %114 = vmatpush1.msra.mxu0 %v35
    %115 = vmatprep.subr.mxu0 0.0
    %116 = vmatpush1.msra.mxu0 0.0
    %117 = vmatprep.subr.mxu0 0.0
    %118 = vmatpush1.msra.mxu0 0.0
    %119 = vmatprep.subr.mxu0 0.0
    %120 = vmatpush1.msra.mxu0 0.0
    %121 = vmatprep.subr.mxu0 0.0
    %122 = vmatpush1.msra.mxu0 0.0
    %123 = vmatprep.subr.mxu0 0.0
    %124 = vmatpush1.msra.mxu0 0.0
    %125 = vmatprep.subr.mxu0 0.0
    %126 = vmatpush1.msra.mxu0 0.0
    %127 = vmatprep.subr.mxu0 0.0
    %128 = vmatpush1.msra.mxu0 0.0
    %129 = vmatprep.subr.mxu0 0.0
    %130 = vmatpush1.msra.mxu0 0.0
    %131 = vmatprep.subr.mxu0 0.0
    %132 = vmatpush1.msra.mxu0 0.0
    %133 = vmatprep.subr.mxu0 0.0
    %134 = vmatpush1.msra.mxu0 0.0
    %135 = vmatprep.subr.mxu0 0.0
    %136 = vmatpush1.msra.mxu0 0.0
    %137 = vmatprep.subr.mxu0 0.0
    %138 = vmatpush1.msra.mxu0 0.0
    %139 = vmatprep.subr.mxu0 0.0
    %140 = vmatpush1.msra.mxu0 0.0
    %141 = vmatprep.subr.mxu0 0.0
    %142 = vmatpush1.msra.mxu0 0.0
    %143 = vmatprep.subr.mxu0 0.0
    %144 = vmatpush1.msra.mxu0 0.0
    %145 = vmatprep.subr.mxu0 0.0
    %146 = vmatpush1.msra.mxu0 0.0
    %147 = vmatprep.subr.mxu0 0.0
    %148 = vmatpush1.msra.mxu0 0.0
    %149 = vmatprep.subr.mxu0 0.0
    %150 = vmatpush1.msra.mxu0 0.0
    %151 = vmatprep.subr.mxu0 0.0
    %152 = vmatpush1.msra.mxu0 0.0
    %153 = vmatprep.subr.mxu0 0.0
    %154 = vmatpush1.msra.mxu0 0.0
    %155 = vmatprep.subr.mxu0 0.0
    %156 = vmatpush1.msra.mxu0 0.0
    %157 = vmatprep.subr.mxu0 0.0
    %158 = vmatpush1.msra.mxu0 0.0
    %159 = vmatprep.subr.mxu0 0.0
    %160 = vmatpush1.msra.mxu0 0.0
    %161 = vmatprep.subr.mxu0 0.0
    %162 = vmatpush1.msra.mxu0 0.0
    %163 = vmatprep.subr.mxu0 0.0
    %164 = vmatpush1.msra.mxu0 0.0
    %165 = vmatprep.subr.mxu0 0.0
    %166 = vmatpush1.msra.mxu0 0.0
    %167 = vmatprep.subr.mxu0 0.0
    %168 = vmatpush1.msra.mxu0 0.0
    %169 = vmatprep.subr.mxu0 0.0
    %170 = vmatpush1.msra.mxu0 0.0
    %171 = vmatprep.subr.mxu0 0.0
    %172 = vmatpush1.msra.mxu0 0.0
    %173 = vmatprep.subr.mxu0 0.0
    %174 = vmatpush1.msra.mxu0 0.0
    %175 = vmatprep.subr.mxu0 0.0
    %176 = vmatpush1.msra.mxu0 0.0
    %177 = vmatprep.mubr.f32.mxu0 0.0
    %178 = vmatmul.mubr.f32.gmra.mrb[0].mxu0 %v111
    %v179 = vpop.f32.mrb[0].mxu0
    %v180 = vadd.f32 0.0, %v179
    %v181 = vpop.f32.mrb[0].mxu0
    %182 = vdwg.mxu0
    %v183 = vld [vmem:[#allocation2] sm:$0xff]
    %v184 = vld [vmem:[#allocation2 + $0x8] sm:$0xff]
    %v185 = vld [vmem:[#allocation2 + $0x10] sm:$0xff]
    %v186 = vld [vmem:[#allocation2 + $0x18] sm:$0xff]
    %v187 = vld [vmem:[#allocation2 + $0x20] sm:$0xff]
    %v188 = vld [vmem:[#allocation2 + $0x28] sm:$0xff]
    %v189 = vld [vmem:[#allocation2 + $0x30] sm:$0xff]
    %v190 = vld [vmem:[#allocation2 + $0x38] sm:$0xff]
    %v191 = vld [vmem:[#allocation2 + $0x40] sm:$0xff]
    %v192 = vld [vmem:[#allocation2 + $0x48] sm:$0xff]
    %v193 = vld [vmem:[#allocation2 + $0x50] sm:$0xff]
    %v194 = vld [vmem:[#allocation2 + $0x58] sm:$0xff]
    %v195 = vld [vmem:[#allocation2 + $0x60] sm:$0xff]
    %v196 = vld [vmem:[#allocation2 + $0x68] sm:$0xff]
    %v197 = vld [vmem:[#allocation2 + $0x70] sm:$0xff]
    %v198 = vld [vmem:[#allocation2 + $0x78] sm:$0xff]
    %v199 = vld [vmem:[#allocation2 + $0x80] sm:$0xff]
    %v200 = vld [vmem:[#allocation2 + $0x88] sm:$0xff]
    %v201 = vld [vmem:[#allocation2 + $0x90] sm:$0xff]
    %v202 = vld [vmem:[#allocation2 + $0x98] sm:$0xff]
    %v203 = vld [vmem:[#allocation2 + $0xa0] sm:$0xff]
    %v204 = vld [vmem:[#allocation2 + $0xa8] sm:$0xff]
    %v205 = vld [vmem:[#allocation2 + $0xb0] sm:$0xff]
    %v206 = vld [vmem:[#allocation2 + $0xb8] sm:$0xff]
    %v207 = vld [vmem:[#allocation2 + $0xc0] sm:$0xff]
    %v208 = vld [vmem:[#allocation2 + $0xc8] sm:$0xff]
    %v209 = vld [vmem:[#allocation2 + $0xd0] sm:$0xff]
    %v210 = vld [vmem:[#allocation2 + $0xd8] sm:$0xff]
    %v211 = vld [vmem:[#allocation2 + $0xe0] sm:$0xff]
    %v212 = vld [vmem:[#allocation2 + $0xe8] sm:$0xff]
    %v213 = vld [vmem:[#allocation2 + $0xf0] sm:$0xff]
    %v214 = vld [vmem:[#allocation2 + $0xf8] sm:$0xff]
    %v215 = vld [vmem:[#allocation2 + $0x100] sm:$0xff]
    %v216 = vld [vmem:[#allocation2 + $0x108] sm:$0xff]
    %v217 = vld [vmem:[#allocation2 + $0x110] sm:$0xff]
    %v218 = vld [vmem:[#allocation2 + $0x118] sm:$0xff]
    %v219 = vld [vmem:[#allocation2 + $0x120] sm:$0xff]
    %v220 = vld [vmem:[#allocation2 + $0x128] sm:$0xff]
    %v221 = vld [vmem:[#allocation2 + $0x130] sm:$0xff]
    %v222 = vld [vmem:[#allocation2 + $0x138] sm:$0xff]
    %v223 = vld [vmem:[#allocation2 + $0x140] sm:$0xff]
    %v224 = vld [vmem:[#allocation2 + $0x148] sm:$0xff]
    %v225 = vld [vmem:[#allocation2 + $0x150] sm:$0xff]
    %v226 = vld [vmem:[#allocation2 + $0x158] sm:$0xff]
    %v227 = vld [vmem:[#allocation2 + $0x160] sm:$0xff]
    %v228 = vld [vmem:[#allocation2 + $0x168] sm:$0xff]
    %v229 = vld [vmem:[#allocation2 + $0x170] sm:$0xff]
    %v230 = vld [vmem:[#allocation2 + $0x178] sm:$0xff]
    %v231 = vld [vmem:[%s3] sm:$0xff]
    %232 = vmatprep.subr.mxu0 0.0
    %233 = vmatpush1.msra.mxu0 %v183
    %234 = vmatprep.subr.mxu0 0.0
    %235 = vmatpush1.msra.mxu0 %v184
    %236 = vmatprep.subr.mxu0 0.0
    %237 = vmatpush1.msra.mxu0 %v185
    %238 = vmatprep.subr.mxu0 0.0
    %239 = vmatpush1.msra.mxu0 %v186
    %240 = vmatprep.subr.mxu0 0.0
    %241 = vmatpush1.msra.mxu0 %v187
    %242 = vmatprep.subr.mxu0 0.0
    %243 = vmatpush1.msra.mxu0 %v188
    %244 = vmatprep.subr.mxu0 0.0
    %245 = vmatpush1.msra.mxu0 %v189
    %246 = vmatprep.subr.mxu0 0.0
    %247 = vmatpush1.msra.mxu0 %v190
    %248 = vmatprep.subr.mxu0 0.0
    %249 = vmatpush1.msra.mxu0 %v191
    %250 = vmatprep.subr.mxu0 0.0
    %251 = vmatpush1.msra.mxu0 %v192
    %252 = vmatprep.subr.mxu0 0.0
    %253 = vmatpush1.msra.mxu0 %v193
    %254 = vmatprep.subr.mxu0 0.0
    %255 = vmatpush1.msra.mxu0 %v194
    %256 = vmatprep.subr.mxu0 0.0
    %257 = vmatpush1.msra.mxu0 %v195
    %258 = vmatprep.subr.mxu0 0.0
    %259 = vmatpush1.msra.mxu0 %v196
    %260 = vmatprep.subr.mxu0 0.0
    %261 = vmatpush1.msra.mxu0 %v197
    %262 = vmatprep.subr.mxu0 0.0
    %263 = vmatpush1.msra.mxu0 %v198
    %264 = vmatprep.subr.mxu0 0.0
    %265 = vmatpush1.msra.mxu0 %v199
    %266 = vmatprep.subr.mxu0 0.0
    %267 = vmatpush1.msra.mxu0 %v200
    %268 = vmatprep.subr.mxu0 0.0
    %269 = vmatpush1.msra.mxu0 %v201
    %270 = vmatprep.subr.mxu0 0.0
    %271 = vmatpush1.msra.mxu0 %v202
    %272 = vmatprep.subr.mxu0 0.0
    %273 = vmatpush1.msra.mxu0 %v203
    %274 = vmatprep.subr.mxu0 0.0
    %275 = vmatpush1.msra.mxu0 %v204
    %276 = vmatprep.subr.mxu0 0.0
    %277 = vmatpush1.msra.mxu0 %v205
    %278 = vmatprep.subr.mxu0 0.0
    %279 = vmatpush1.msra.mxu0 %v206
    %280 = vmatprep.subr.mxu0 0.0
    %281 = vmatpush1.msra.mxu0 %v207
    %282 = vmatprep.subr.mxu0 0.0
    %283 = vmatpush1.msra.mxu0 %v208
    %284 = vmatprep.subr.mxu0 0.0
    %285 = vmatpush1.msra.mxu0 %v209
    %286 = vmatprep.subr.mxu0 0.0
    %287 = vmatpush1.msra.mxu0 %v210
    %288 = vmatprep.subr.mxu0 0.0
    %289 = vmatpush1.msra.mxu0 %v211
    %290 = vmatprep.subr.mxu0 0.0
    %291 = vmatpush1.msra.mxu0 %v212
    %292 = vmatprep.subr.mxu0 0.0
    %293 = vmatpush1.msra.mxu0 %v213
    %294 = vmatprep.subr.mxu0 0.0
    %295 = vmatpush1.msra.mxu0 %v214
    %296 = vmatprep.mubr.f32.mxu0 %v180
    %297 = vmatmul.mubr.f32.gmra.mrb[0].mxu0 %v107
    %v298 = vpop.f32.mrb[0].mxu0
    %v299 = vadd.f32 %v231, %v298
    %v300 = vpop.f32.mrb[0].mxu0
    %301 = vdwg.mxu0
    %302 = vmatprep.subr.mxu0 0.0
    %303 = vmatpush1.msra.mxu0 %v215
    %304 = vmatprep.subr.mxu0 0.0
    %305 = vmatpush1.msra.mxu0 %v216
    %306 = vmatprep.subr.mxu0 0.0
    %307 = vmatpush1.msra.mxu0 %v217
    %308 = vmatprep.subr.mxu0 0.0
    %309 = vmatpush1.msra.mxu0 %v218
    %310 = vmatprep.subr.mxu0 0.0
    %311 = vmatpush1.msra.mxu0 %v219
    %312 = vmatprep.subr.mxu0 0.0
    %313 = vmatpush1.msra.mxu0 %v220
    %314 = vmatprep.subr.mxu0 0.0
    %315 = vmatpush1.msra.mxu0 %v221
    %316 = vmatprep.subr.mxu0 0.0
    %317 = vmatpush1.msra.mxu0 %v222
    %318 = vmatprep.subr.mxu0 0.0
    %319 = vmatpush1.msra.mxu0 %v223
    %320 = vmatprep.subr.mxu0 0.0
    %321 = vmatpush1.msra.mxu0 %v224
    %322 = vmatprep.subr.mxu0 0.0
    %323 = vmatpush1.msra.mxu0 %v225
    %324 = vmatprep.subr.mxu0 0.0
    %325 = vmatpush1.msra.mxu0 %v226
    %326 = vmatprep.subr.mxu0 0.0
    %327 = vmatpush1.msra.mxu0 %v227
    %328 = vmatprep.subr.mxu0 0.0
    %329 = vmatpush1.msra.mxu0 %v228
    %330 = vmatprep.subr.mxu0 0.0
    %331 = vmatpush1.msra.mxu0 %v229
    %332 = vmatprep.subr.mxu0 0.0
    %333 = vmatpush1.msra.mxu0 %v230
    %334 = vmatprep.subr.mxu0 0.0
    %335 = vmatpush1.msra.mxu0 0.0
    %336 = vmatprep.subr.mxu0 0.0
    %337 = vmatpush1.msra.mxu0 0.0
    %338 = vmatprep.subr.mxu0 0.0
    %339 = vmatpush1.msra.mxu0 0.0
    %340 = vmatprep.subr.mxu0 0.0
    %341 = vmatpush1.msra.mxu0 0.0
    %342 = vmatprep.subr.mxu0 0.0
    %343 = vmatpush1.msra.mxu0 0.0
    %344 = vmatprep.subr.mxu0 0.0
    %345 = vmatpush1.msra.mxu0 0.0
    %346 = vmatprep.subr.mxu0 0.0
    %347 = vmatpush1.msra.mxu0 0.0
    %348 = vmatprep.subr.mxu0 0.0
    %349 = vmatpush1.msra.mxu0 0.0
    %350 = vmatprep.subr.mxu0 0.0
    %351 = vmatpush1.msra.mxu0 0.0
    %352 = vmatprep.subr.mxu0 0.0
    %353 = vmatpush1.msra.mxu0 0.0
    %354 = vmatprep.subr.mxu0 0.0
    %355 = vmatpush1.msra.mxu0 0.0
    %356 = vmatprep.subr.mxu0 0.0
    %357 = vmatpush1.msra.mxu0 0.0
    %358 = vmatprep.subr.mxu0 0.0
    %359 = vmatpush1.msra.mxu0 0.0
    %360 = vmatprep.subr.mxu0 0.0
    %361 = vmatpush1.msra.mxu0 0.0
    %362 = vmatprep.subr.mxu0 0.0
    %363 = vmatpush1.msra.mxu0 0.0
    %364 = vmatprep.subr.mxu0 0.0
    %365 = vmatpush1.msra.mxu0 0.0
    %366 = vmatprep.mubr.f32.mxu0 0.0
    %367 = vmatmul.mubr.f32.gmra.mrb[0].mxu0 %v34
    %v368 = vpop.f32.mrb[0].mxu0
    %v369 = vadd.f32 %v299, %v368
    %v370 = vpop.f32.mrb[0].mxu0
    %371 = vdwg.mxu0
    %v372 = vmax.f32 %v369, 0.0
    %v374 = vsel %vm36, %v32, 0
    %376 = vmatprep.subr.mxu0 0.0
    %377 = vmatpush1.msra.mxu0 %v34
    %378 = vmatprep.subr.mxu0 0.0
    %379 = vmatpush1.msra.mxu0 0.0
    %380 = vmatprep.subr.mxu0 0.0
    %381 = vmatpush1.msra.mxu0 0.0
    %382 = vmatprep.subr.mxu0 0.0
    %383 = vmatpush1.msra.mxu0 0.0
    %384 = vmatprep.subr.mxu0 0.0
    %385 = vmatpush1.msra.mxu0 0.0
    %386 = vmatprep.subr.mxu0 0.0
    %387 = vmatpush1.msra.mxu0 0.0
    %388 = vmatprep.subr.mxu0 0.0
    %389 = vmatpush1.msra.mxu0 0.0
    %390 = vmatprep.subr.mxu0 0.0
    %391 = vmatpush1.msra.mxu0 0.0
    %392 = vmatprep.subr.mxu0 0.0
    %393 = vmatpush1.msra.mxu0 0.0
    %394 = vmatprep.subr.mxu0 0.0
    %395 = vmatpush1.msra.mxu0 0.0
    %396 = vmatprep.subr.mxu0 0.0
    %397 = vmatpush1.msra.mxu0 0.0
    %398 = vmatprep.subr.mxu0 0.0
    %399 = vmatpush1.msra.mxu0 0.0
    %400 = vmatprep.subr.mxu0 0.0
    %401 = vmatpush1.msra.mxu0 0.0
    %402 = vmatprep.subr.mxu0 0.0
    %403 = vmatpush1.msra.mxu0 0.0
    %404 = vmatprep.subr.mxu0 0.0
    %405 = vmatpush1.msra.mxu0 0.0
    %406 = vmatprep.subr.mxu0 0.0
    %407 = vmatpush1.msra.mxu0 0.0
    %408 = vmatprep.subr.mxu0 0.0
    %409 = vmatpush1.msra.mxu0 0.0
    %410 = vmatprep.subr.mxu0 0.0
    %411 = vmatpush1.msra.mxu0 0.0
    %412 = vmatprep.subr.mxu0 0.0
    %413 = vmatpush1.msra.mxu0 0.0
    %414 = vmatprep.subr.mxu0 0.0
    %415 = vmatpush1.msra.mxu0 0.0
    %416 = vmatprep.subr.mxu0 0.0
    %417 = vmatpush1.msra.mxu0 0.0
    %418 = vmatprep.subr.mxu0 0.0
    %419 = vmatpush1.msra.mxu0 0.0
    %420 = vmatprep.subr.mxu0 0.0
    %421 = vmatpush1.msra.mxu0 0.0
    %422 = vmatprep.subr.mxu0 0.0
    %423 = vmatpush1.msra.mxu0 0.0
    %424 = vmatprep.subr.mxu0 0.0
    %425 = vmatpush1.msra.mxu0 0.0
    %426 = vmatprep.subr.mxu0 0.0
    %427 = vmatpush1.msra.mxu0 0.0
    %428 = vmatprep.subr.mxu0 0.0
    %429 = vmatpush1.msra.mxu0 0.0
    %430 = vmatprep.subr.mxu0 0.0
    %431 = vmatpush1.msra.mxu0 0.0
    %432 = vmatprep.subr.mxu0 0.0
    %433 = vmatpush1.msra.mxu0 0.0
    %434 = vmatprep.subr.mxu0 0.0
    %435 = vmatpush1.msra.mxu0 0.0
    %436 = vmatprep.subr.mxu0 0.0
    %437 = vmatpush1.msra.mxu0 0.0
    %438 = vmatprep.subr.mxu0 0.0
    %439 = vmatpush1.msra.mxu0 0.0
    %440 = vmatprep.mubr.f32.mxu0 0.0
    %441 = vmatmul.mubr.f32.gmra.mrb[0].mxu0 %v374
    %v442 = vpop.f32.mrb[0].mxu0
    %v443 = vadd.f32 0.0, %v442
    %v444 = vpop.f32.mrb[0].mxu0
    %445 = vdwg.mxu0
    %v446 = vld [vmem:[#allocation2 + $0x180] sm:$0xff]
    %v447 = vld [vmem:[#allocation2 + $0x188] sm:$0xff]
    %v448 = vld [vmem:[#allocation2 + $0x190] sm:$0xff]
    %v449 = vld [vmem:[#allocation2 + $0x198] sm:$0xff]
    %v450 = vld [vmem:[#allocation2 + $0x1a0] sm:$0xff]
    %v451 = vld [vmem:[#allocation2 + $0x1a8] sm:$0xff]
    %v452 = vld [vmem:[#allocation2 + $0x1b0] sm:$0xff]
    %v453 = vld [vmem:[#allocation2 + $0x1b8] sm:$0xff]
    %v454 = vld [vmem:[#allocation2 + $0x1c0] sm:$0xff]
    %v455 = vld [vmem:[#allocation2 + $0x1c8] sm:$0xff]
    %v456 = vld [vmem:[#allocation2 + $0x1d0] sm:$0xff]
    %v457 = vld [vmem:[#allocation2 + $0x1d8] sm:$0xff]
    %v458 = vld [vmem:[#allocation2 + $0x1e0] sm:$0xff]
    %v459 = vld [vmem:[#allocation2 + $0x1e8] sm:$0xff]
    %v460 = vld [vmem:[#allocation2 + $0x1f0] sm:$0xff]
    %v461 = vld [vmem:[#allocation2 + $0x1f8] sm:$0xff]
    %v462 = vld [vmem:[#allocation2 + $0x200] sm:$0xff]
    %v463 = vld [vmem:[#allocation2 + $0x208] sm:$0xff]
    %v464 = vld [vmem:[#allocation2 + $0x210] sm:$0xff]
    %v465 = vld [vmem:[#allocation2 + $0x218] sm:$0xff]
    %v466 = vld [vmem:[#allocation2 + $0x220] sm:$0xff]
    %v467 = vld [vmem:[#allocation2 + $0x228] sm:$0xff]
    %v468 = vld [vmem:[#allocation2 + $0x230] sm:$0xff]
    %v469 = vld [vmem:[#allocation2 + $0x238] sm:$0xff]
    %v470 = vld [vmem:[#allocation2 + $0x240] sm:$0xff]
    %v471 = vld [vmem:[#allocation2 + $0x248] sm:$0xff]
    %v472 = vld [vmem:[#allocation2 + $0x250] sm:$0xff]
    %v473 = vld [vmem:[#allocation2 + $0x258] sm:$0xff]
    %v474 = vld [vmem:[#allocation2 + $0x260] sm:$0xff]
    %v475 = vld [vmem:[#allocation2 + $0x268] sm:$0xff]
    %v476 = vld [vmem:[#allocation2 + $0x270] sm:$0xff]
    %v477 = vld [vmem:[#allocation2 + $0x278] sm:$0xff]
    %v478 = vld [vmem:[%s3 + $0x8] sm:$0xff]
    %479 = vmatprep.subr.mxu0 0.0
    %480 = vmatpush1.msra.mxu0 %v446
    %481 = vmatprep.subr.mxu0 0.0
    %482 = vmatpush1.msra.mxu0 %v447
    %483 = vmatprep.subr.mxu0 0.0
    %484 = vmatpush1.msra.mxu0 %v448
    %485 = vmatprep.subr.mxu0 0.0
    %486 = vmatpush1.msra.mxu0 %v449
    %487 = vmatprep.subr.mxu0 0.0
    %488 = vmatpush1.msra.mxu0 %v450
    %489 = vmatprep.subr.mxu0 0.0
    %490 = vmatpush1.msra.mxu0 %v451
    %491 = vmatprep.subr.mxu0 0.0
    %492 = vmatpush1.msra.mxu0 %v452
    %493 = vmatprep.subr.mxu0 0.0
    %494 = vmatpush1.msra.mxu0 %v453
    %495 = vmatprep.subr.mxu0 0.0
    %496 = vmatpush1.msra.mxu0 %v454
    %497 = vmatprep.subr.mxu0 0.0
    %498 = vmatpush1.msra.mxu0 %v455
    %499 = vmatprep.subr.mxu0 0.0
    %500 = vmatpush1.msra.mxu0 %v456
    %501 = vmatprep.subr.mxu0 0.0
    %502 = vmatpush1.msra.mxu0 %v457
    %503 = vmatprep.subr.mxu0 0.0
    %504 = vmatpush1.msra.mxu0 %v458
    %505 = vmatprep.subr.mxu0 0.0
    %506 = vmatpush1.msra.mxu0 %v459
    %507 = vmatprep.subr.mxu0 0.0
    %508 = vmatpush1.msra.mxu0 %v460
    %509 = vmatprep.subr.mxu0 0.0
    %510 = vmatpush1.msra.mxu0 %v461
    %511 = vmatprep.subr.mxu0 0.0
    %512 = vmatpush1.msra.mxu0 %v462
    %513 = vmatprep.subr.mxu0 0.0
    %514 = vmatpush1.msra.mxu0 %v463
    %515 = vmatprep.subr.mxu0 0.0
    %516 = vmatpush1.msra.mxu0 %v464
    %517 = vmatprep.subr.mxu0 0.0
    %518 = vmatpush1.msra.mxu0 %v465
    %519 = vmatprep.subr.mxu0 0.0
    %520 = vmatpush1.msra.mxu0 %v466
    %521 = vmatprep.subr.mxu0 0.0
    %522 = vmatpush1.msra.mxu0 %v467
    %523 = vmatprep.subr.mxu0 0.0
    %524 = vmatpush1.msra.mxu0 %v468
    %525 = vmatprep.subr.mxu0 0.0
    %526 = vmatpush1.msra.mxu0 %v469
    %527 = vmatprep.subr.mxu0 0.0
    %528 = vmatpush1.msra.mxu0 %v470
    %529 = vmatprep.subr.mxu0 0.0
    %530 = vmatpush1.msra.mxu0 %v471
    %531 = vmatprep.subr.mxu0 0.0
    %532 = vmatpush1.msra.mxu0 %v472
    %533 = vmatprep.subr.mxu0 0.0
    %534 = vmatpush1.msra.mxu0 %v473
    %535 = vmatprep.subr.mxu0 0.0
    %536 = vmatpush1.msra.mxu0 %v474
    %537 = vmatprep.subr.mxu0 0.0
    %538 = vmatpush1.msra.mxu0 %v475
    %539 = vmatprep.subr.mxu0 0.0
    %540 = vmatpush1.msra.mxu0 %v476
    %541 = vmatprep.subr.mxu0 0.0
    %542 = vmatpush1.msra.mxu0 %v477
    %543 = vmatprep.mubr.f32.mxu0 %v35
    %544 = vmatmul.mubr.f32.gmra.mrb[0].mxu0 %v443
    %v545 = vpop.f32.mrb[0].mxu0
    %v546 = vadd.f32 %v478, %v545
    %v547 = vpop.f32.mrb[0].mxu0
    %548 = vdwg.mxu0
    %v549 = vmax.f32 %v546, 0.0
    %550 = vmatprep.subr.mxu0 0.0
    %551 = vmatpush1.msra.mxu0 %v372
    %552 = vmatprep.subr.mxu0 0.0
    %553 = vmatpush1.msra.mxu0 0.0
    %554 = vmatprep.subr.mxu0 0.0
    %555 = vmatpush1.msra.mxu0 0.0
    %556 = vmatprep.subr.mxu0 0.0
    %557 = vmatpush1.msra.mxu0 0.0
    %558 = vmatprep.subr.mxu0 0.0
    %559 = vmatpush1.msra.mxu0 0.0
    %560 = vmatprep.subr.mxu0 0.0
    %561 = vmatpush1.msra.mxu0 0.0
    %562 = vmatprep.subr.mxu0 0.0
    %563 = vmatpush1.msra.mxu0 0.0
    %564 = vmatprep.subr.mxu0 0.0
    %565 = vmatpush1.msra.mxu0 0.0
    %566 = vmatprep.subr.mxu0 0.0
    %567 = vmatpush1.msra.mxu0 0.0
    %568 = vmatprep.subr.mxu0 0.0
    %569 = vmatpush1.msra.mxu0 0.0
    %570 = vmatprep.subr.mxu0 0.0
    %571 = vmatpush1.msra.mxu0 0.0
    %572 = vmatprep.subr.mxu0 0.0
    %573 = vmatpush1.msra.mxu0 0.0
    %574 = vmatprep.subr.mxu0 0.0
    %575 = vmatpush1.msra.mxu0 0.0
    %576 = vmatprep.subr.mxu0 0.0
    %577 = vmatpush1.msra.mxu0 0.0
    %578 = vmatprep.subr.mxu0 0.0
    %579 = vmatpush1.msra.mxu0 0.0
    %580 = vmatprep.subr.mxu0 0.0
    %581 = vmatpush1.msra.mxu0 0.0
    %582 = vmatprep.subr.mxu0 0.0
    %583 = vmatpush1.msra.mxu0 0.0
    %584 = vmatprep.subr.mxu0 0.0
    %585 = vmatpush1.msra.mxu0 0.0
    %586 = vmatprep.subr.mxu0 0.0
    %587 = vmatpush1.msra.mxu0 0.0
    %588 = vmatprep.subr.mxu0 0.0
    %589 = vmatpush1.msra.mxu0 0.0
    %590 = vmatprep.subr.mxu0 0.0
    %591 = vmatpush1.msra.mxu0 0.0
    %592 = vmatprep.subr.mxu0 0.0
    %593 = vmatpush1.msra.mxu0 0.0
    %594 = vmatprep.subr.mxu0 0.0
    %595 = vmatpush1.msra.mxu0 0.0
    %596 = vmatprep.subr.mxu0 0.0
    %597 = vmatpush1.msra.mxu0 0.0
    %598 = vmatprep.subr.mxu0 0.0
    %599 = vmatpush1.msra.mxu0 0.0
    %600 = vmatprep.subr.mxu0 0.0
    %601 = vmatpush1.msra.mxu0 0.0
    %602 = vmatprep.subr.mxu0 0.0
    %603 = vmatpush1.msra.mxu0 0.0
    %604 = vmatprep.subr.mxu0 0.0
    %605 = vmatpush1.msra.mxu0 0.0
    %606 = vmatprep.subr.mxu0 0.0
    %607 = vmatpush1.msra.mxu0 0.0
    %608 = vmatprep.subr.mxu0 0.0
    %609 = vmatpush1.msra.mxu0 0.0
    %610 = vmatprep.subr.mxu0 0.0
    %611 = vmatpush1.msra.mxu0 0.0
    %612 = vmatprep.subr.mxu0 0.0
    %613 = vmatpush1.msra.mxu0 0.0
    %614 = vmatprep.mubr.f32.mxu0 0.0
    %615 = vmatmul.mubr.f32.gmra.mrb[0].mxu0 %v38
    %v616 = vpop.f32.mrb[0].mxu0
    %v617 = vadd.f32 0.0, %v616
    %v618 = vpop.f32.mrb[0].mxu0
    %619 = vdwg.mxu0
    %620 = vmatprep.subr.mxu0 0.0
    %621 = vmatpush1.msra.mxu0 %v549
    %622 = vmatprep.subr.mxu0 0.0
    %623 = vmatpush1.msra.mxu0 0.0
    %624 = vmatprep.subr.mxu0 0.0
    %625 = vmatpush1.msra.mxu0 0.0
    %626 = vmatprep.subr.mxu0 0.0
    %627 = vmatpush1.msra.mxu0 0.0
    %628 = vmatprep.subr.mxu0 0.0
    %629 = vmatpush1.msra.mxu0 0.0
    %630 = vmatprep.subr.mxu0 0.0
    %631 = vmatpush1.msra.mxu0 0.0
    %632 = vmatprep.subr.mxu0 0.0
    %633 = vmatpush1.msra.mxu0 0.0
    %634 = vmatprep.subr.mxu0 0.0
    %635 = vmatpush1.msra.mxu0 0.0
    %636 = vmatprep.subr.mxu0 0.0
    %637 = vmatpush1.msra.mxu0 0.0
    %638 = vmatprep.subr.mxu0 0.0
    %639 = vmatpush1.msra.mxu0 0.0
    %640 = vmatprep.subr.mxu0 0.0
    %641 = vmatpush1.msra.mxu0 0.0
    %642 = vmatprep.subr.mxu0 0.0
    %643 = vmatpush1.msra.mxu0 0.0
    %644 = vmatprep.subr.mxu0 0.0
    %645 = vmatpush1.msra.mxu0 0.0
    %646 = vmatprep.subr.mxu0 0.0
    %647 = vmatpush1.msra.mxu0 0.0
    %648 = vmatprep.subr.mxu0 0.0
    %649 = vmatpush1.msra.mxu0 0.0
    %650 = vmatprep.subr.mxu0 0.0
    %651 = vmatpush1.msra.mxu0 0.0
    %652 = vmatprep.subr.mxu0 0.0
    %653 = vmatpush1.msra.mxu0 0.0
    %654 = vmatprep.subr.mxu0 0.0
    %655 = vmatpush1.msra.mxu0 0.0
    %656 = vmatprep.subr.mxu0 0.0
    %657 = vmatpush1.msra.mxu0 0.0
    %658 = vmatprep.subr.mxu0 0.0
    %659 = vmatpush1.msra.mxu0 0.0
    %660 = vmatprep.subr.mxu0 0.0
    %661 = vmatpush1.msra.mxu0 0.0
    %662 = vmatprep.subr.mxu0 0.0
    %663 = vmatpush1.msra.mxu0 0.0
    %664 = vmatprep.subr.mxu0 0.0
    %665 = vmatpush1.msra.mxu0 0.0
    %666 = vmatprep.subr.mxu0 0.0
    %667 = vmatpush1.msra.mxu0 0.0
    %668 = vmatprep.subr.mxu0 0.0
    %669 = vmatpush1.msra.mxu0 0.0
    %670 = vmatprep.subr.mxu0 0.0
    %671 = vmatpush1.msra.mxu0 0.0
    %672 = vmatprep.subr.mxu0 0.0
    %673 = vmatpush1.msra.mxu0 0.0
    %674 = vmatprep.subr.mxu0 0.0
    %675 = vmatpush1.msra.mxu0 0.0
    %676 = vmatprep.subr.mxu0 0.0
    %677 = vmatpush1.msra.mxu0 0.0
    %678 = vmatprep.subr.mxu0 0.0
    %679 = vmatpush1.msra.mxu0 0.0
    %680 = vmatprep.subr.mxu0 0.0
    %681 = vmatpush1.msra.mxu0 0.0
    %682 = vmatprep.subr.mxu0 0.0
    %683 = vmatpush1.msra.mxu0 0.0
    %684 = vmatprep.mubr.f32.mxu0 0.0
    %685 = vmatmul.mubr.f32.gmra.mrb[0].mxu0 %v111
    %v686 = vpop.f32.mrb[0].mxu0
    %v687 = vadd.f32 0.0, %v686
    %v688 = vpop.f32.mrb[0].mxu0
    %689 = vdwg.mxu0
    %v690 = vld [vmem:[#allocation2 + $0x280] sm:$0xff]
    %v691 = vld [vmem:[#allocation2 + $0x288] sm:$0xff]
    %v692 = vld [vmem:[#allocation2 + $0x290] sm:$0xff]
    %v693 = vld [vmem:[#allocation2 + $0x298] sm:$0xff]
    %v694 = vld [vmem:[#allocation2 + $0x2a0] sm:$0xff]
    %v695 = vld [vmem:[#allocation2 + $0x2a8] sm:$0xff]
    %v696 = vld [vmem:[#allocation2 + $0x2b0] sm:$0xff]
    %v697 = vld [vmem:[#allocation2 + $0x2b8] sm:$0xff]
    %v698 = vld [vmem:[#allocation2 + $0x2c0] sm:$0xff]
    %v699 = vld [vmem:[#allocation2 + $0x2c8] sm:$0xff]
    %v700 = vld [vmem:[#allocation2 + $0x2d0] sm:$0xff]
    %v701 = vld [vmem:[#allocation2 + $0x2d8] sm:$0xff]
    %v702 = vld [vmem:[#allocation2 + $0x2e0] sm:$0xff]
    %v703 = vld [vmem:[#allocation2 + $0x2e8] sm:$0xff]
    %v704 = vld [vmem:[#allocation2 + $0x2f0] sm:$0xff]
    %v705 = vld [vmem:[#allocation2 + $0x2f8] sm:$0xff]
    %v706 = vld [vmem:[#allocation2 + $0x300] sm:$0xff]
    %v707 = vld [vmem:[#allocation2 + $0x308] sm:$0xff]
    %v708 = vld [vmem:[#allocation2 + $0x310] sm:$0xff]
    %v709 = vld [vmem:[#allocation2 + $0x318] sm:$0xff]
    %v710 = vld [vmem:[#allocation2 + $0x320] sm:$0xff]
    %v711 = vld [vmem:[#allocation2 + $0x328] sm:$0xff]
    %v712 = vld [vmem:[#allocation2 + $0x330] sm:$0xff]
    %v713 = vld [vmem:[#allocation2 + $0x338] sm:$0xff]
    %v714 = vld [vmem:[#allocation2 + $0x340] sm:$0xff]
    %v715 = vld [vmem:[#allocation2 + $0x348] sm:$0xff]
    %v716 = vld [vmem:[#allocation2 + $0x350] sm:$0xff]
    %v717 = vld [vmem:[#allocation2 + $0x358] sm:$0xff]
    %v718 = vld [vmem:[#allocation2 + $0x360] sm:$0xff]
    %v719 = vld [vmem:[#allocation2 + $0x368] sm:$0xff]
    %v720 = vld [vmem:[#allocation2 + $0x370] sm:$0xff]
    %v721 = vld [vmem:[#allocation2 + $0x378] sm:$0xff]
    %v722 = vld [vmem:[#allocation2 + $0x380] sm:$0xff]
    %v723 = vld [vmem:[#allocation2 + $0x388] sm:$0xff]
    %v724 = vld [vmem:[#allocation2 + $0x390] sm:$0xff]
    %v725 = vld [vmem:[#allocation2 + $0x398] sm:$0xff]
    %v726 = vld [vmem:[#allocation2 + $0x3a0] sm:$0xff]
    %v727 = vld [vmem:[#allocation2 + $0x3a8] sm:$0xff]
    %v728 = vld [vmem:[#allocation2 + $0x3b0] sm:$0xff]
    %v729 = vld [vmem:[#allocation2 + $0x3b8] sm:$0xff]
    %v730 = vld [vmem:[#allocation2 + $0x3c0] sm:$0xff]
    %v731 = vld [vmem:[#allocation2 + $0x3c8] sm:$0xff]
    %v732 = vld [vmem:[#allocation2 + $0x3d0] sm:$0xff]
    %v733 = vld [vmem:[#allocation2 + $0x3d8] sm:$0xff]
    %v734 = vld [vmem:[#allocation2 + $0x3e0] sm:$0xff]
    %v735 = vld [vmem:[#allocation2 + $0x3e8] sm:$0xff]
    %v736 = vld [vmem:[#allocation2 + $0x3f0] sm:$0xff]
    %v737 = vld [vmem:[#allocation2 + $0x3f8] sm:$0xff]
    %v738 = vld [vmem:[%s3 + $0x10] sm:$0xff]
    %739 = vmatprep.subr.mxu0 0.0
    %740 = vmatpush1.msra.mxu0 %v690
    %741 = vmatprep.subr.mxu0 0.0
    %742 = vmatpush1.msra.mxu0 %v691
    %743 = vmatprep.subr.mxu0 0.0
    %744 = vmatpush1.msra.mxu0 %v692
    %745 = vmatprep.subr.mxu0 0.0
    %746 = vmatpush1.msra.mxu0 %v693
    %747 = vmatprep.subr.mxu0 0.0
    %748 = vmatpush1.msra.mxu0 %v694
    %749 = vmatprep.subr.mxu0 0.0
    %750 = vmatpush1.msra.mxu0 %v695
    %751 = vmatprep.subr.mxu0 0.0
    %752 = vmatpush1.msra.mxu0 %v696
    %753 = vmatprep.subr.mxu0 0.0
    %754 = vmatpush1.msra.mxu0 %v697
    %755 = vmatprep.subr.mxu0 0.0
    %756 = vmatpush1.msra.mxu0 %v698
    %757 = vmatprep.subr.mxu0 0.0
    %758 = vmatpush1.msra.mxu0 %v699
    %759 = vmatprep.subr.mxu0 0.0
    %760 = vmatpush1.msra.mxu0 %v700
    %761 = vmatprep.subr.mxu0 0.0
    %762 = vmatpush1.msra.mxu0 %v701
    %763 = vmatprep.subr.mxu0 0.0
    %764 = vmatpush1.msra.mxu0 %v702
    %765 = vmatprep.subr.mxu0 0.0
    %766 = vmatpush1.msra.mxu0 %v703
    %767 = vmatprep.subr.mxu0 0.0
    %768 = vmatpush1.msra.mxu0 %v704
    %769 = vmatprep.subr.mxu0 0.0
    %770 = vmatpush1.msra.mxu0 %v705
    %771 = vmatprep.subr.mxu0 0.0
    %772 = vmatpush1.msra.mxu0 %v706
    %773 = vmatprep.subr.mxu0 0.0
    %774 = vmatpush1.msra.mxu0 %v707
    %775 = vmatprep.subr.mxu0 0.0
    %776 = vmatpush1.msra.mxu0 %v708
    %777 = vmatprep.subr.mxu0 0.0
    %778 = vmatpush1.msra.mxu0 %v709
    %779 = vmatprep.subr.mxu0 0.0
    %780 = vmatpush1.msra.mxu0 %v710
    %781 = vmatprep.subr.mxu0 0.0
    %782 = vmatpush1.msra.mxu0 %v711
    %783 = vmatprep.subr.mxu0 0.0
    %784 = vmatpush1.msra.mxu0 %v712
    %785 = vmatprep.subr.mxu0 0.0
    %786 = vmatpush1.msra.mxu0 %v713
    %787 = vmatprep.subr.mxu0 0.0
    %788 = vmatpush1.msra.mxu0 %v714
    %789 = vmatprep.subr.mxu0 0.0
    %790 = vmatpush1.msra.mxu0 %v715
    %791 = vmatprep.subr.mxu0 0.0
    %792 = vmatpush1.msra.mxu0 %v716
    %793 = vmatprep.subr.mxu0 0.0
    %794 = vmatpush1.msra.mxu0 %v717
    %795 = vmatprep.subr.mxu0 0.0
    %796 = vmatpush1.msra.mxu0 %v718
    %797 = vmatprep.subr.mxu0 0.0
    %798 = vmatpush1.msra.mxu0 %v719
    %799 = vmatprep.subr.mxu0 0.0
    %800 = vmatpush1.msra.mxu0 %v720
    %801 = vmatprep.subr.mxu0 0.0
    %802 = vmatpush1.msra.mxu0 %v721
    %803 = vmatprep.mubr.f32.mxu0 %v687
    %804 = vmatmul.mubr.f32.gmra.mrb[0].mxu0 %v617
    %v805 = vpop.f32.mrb[0].mxu0
    %v806 = vadd.f32 %v738, %v805
    %v807 = vpop.f32.mrb[0].mxu0
    %808 = vdwg.mxu0
    %809 = vmatprep.subr.mxu0 0.0
    %810 = vmatpush1.msra.mxu0 %v722
    %811 = vmatprep.subr.mxu0 0.0
    %812 = vmatpush1.msra.mxu0 %v723
    %813 = vmatprep.subr.mxu0 0.0
    %814 = vmatpush1.msra.mxu0 %v724
    %815 = vmatprep.subr.mxu0 0.0
    %816 = vmatpush1.msra.mxu0 %v725
    %817 = vmatprep.subr.mxu0 0.0
    %818 = vmatpush1.msra.mxu0 %v726
    %819 = vmatprep.subr.mxu0 0.0
    %820 = vmatpush1.msra.mxu0 %v727
    %821 = vmatprep.subr.mxu0 0.0
    %822 = vmatpush1.msra.mxu0 %v728
    %823 = vmatprep.subr.mxu0 0.0
    %824 = vmatpush1.msra.mxu0 %v729
    %825 = vmatprep.subr.mxu0 0.0
    %826 = vmatpush1.msra.mxu0 %v730
    %827 = vmatprep.subr.mxu0 0.0
    %828 = vmatpush1.msra.mxu0 %v731
    %829 = vmatprep.subr.mxu0 0.0
    %830 = vmatpush1.msra.mxu0 %v732
    %831 = vmatprep.subr.mxu0 0.0
    %832 = vmatpush1.msra.mxu0 %v733
    %833 = vmatprep.subr.mxu0 0.0
    %834 = vmatpush1.msra.mxu0 %v734
    %835 = vmatprep.subr.mxu0 0.0
    %836 = vmatpush1.msra.mxu0 %v735
    %837 = vmatprep.subr.mxu0 0.0
    %838 = vmatpush1.msra.mxu0 %v736
    %839 = vmatprep.subr.mxu0 0.0
    %840 = vmatpush1.msra.mxu0 %v737
    %841 = vmatprep.subr.mxu0 0.0
    %842 = vmatpush1.msra.mxu0 0.0
    %843 = vmatprep.subr.mxu0 0.0
    %844 = vmatpush1.msra.mxu0 0.0
    %845 = vmatprep.subr.mxu0 0.0
    %846 = vmatpush1.msra.mxu0 0.0
    %847 = vmatprep.subr.mxu0 0.0
    %848 = vmatpush1.msra.mxu0 0.0
    %849 = vmatprep.subr.mxu0 0.0
    %850 = vmatpush1.msra.mxu0 0.0
    %851 = vmatprep.subr.mxu0 0.0
    %852 = vmatpush1.msra.mxu0 0.0
    %853 = vmatprep.subr.mxu0 0.0
    %854 = vmatpush1.msra.mxu0 0.0
    %855 = vmatprep.subr.mxu0 0.0
    %856 = vmatpush1.msra.mxu0 0.0
    %857 = vmatprep.subr.mxu0 0.0
    %858 = vmatpush1.msra.mxu0 0.0
    %859 = vmatprep.subr.mxu0 0.0
    %860 = vmatpush1.msra.mxu0 0.0
    %861 = vmatprep.subr.mxu0 0.0
    %862 = vmatpush1.msra.mxu0 0.0
    %863 = vmatprep.subr.mxu0 0.0
    %864 = vmatpush1.msra.mxu0 0.0
    %865 = vmatprep.subr.mxu0 0.0
    %866 = vmatpush1.msra.mxu0 0.0
    %867 = vmatprep.subr.mxu0 0.0
    %868 = vmatpush1.msra.mxu0 0.0
    %869 = vmatprep.subr.mxu0 0.0
    %870 = vmatpush1.msra.mxu0 0.0
    %871 = vmatprep.subr.mxu0 0.0
    %872 = vmatpush1.msra.mxu0 0.0
    %873 = vmatprep.mubr.f32.mxu0 0.0
    %874 = vmatmul.mubr.f32.gmra.mrb[0].mxu0 %v372
    %v875 = vpop.f32.mrb[0].mxu0
    %v876 = vadd.f32 %v806, %v875
    %v877 = vpop.f32.mrb[0].mxu0
    %878 = vdwg.mxu0
    %v879 = vmax.f32 %v876, 0.0
    %880 = vmatprep.subr.mxu0 0.0
    %881 = vmatpush1.msra.mxu0 %v372
    %882 = vmatprep.subr.mxu0 0.0
    %883 = vmatpush1.msra.mxu0 0.0
    %884 = vmatprep.subr.mxu0 0.0
    %885 = vmatpush1.msra.mxu0 0.0
    %886 = vmatprep.subr.mxu0 0.0
    %887 = vmatpush1.msra.mxu0 0.0
    %888 = vmatprep.subr.mxu0 0.0
    %889 = vmatpush1.msra.mxu0 0.0
    %890 = vmatprep.subr.mxu0 0.0
    %891 = vmatpush1.msra.mxu0 0.0
    %892 = vmatprep.subr.mxu0 0.0
    %893 = vmatpush1.msra.mxu0 0.0
    %894 = vmatprep.subr.mxu0 0.0
    %895 = vmatpush1.msra.mxu0 0.0
    %896 = vmatprep.subr.mxu0 0.0
    %897 = vmatpush1.msra.mxu0 0.0
    %898 = vmatprep.subr.mxu0 0.0
    %899 = vmatpush1.msra.mxu0 0.0
    %900 = vmatprep.subr.mxu0 0.0
    %901 = vmatpush1.msra.mxu0 0.0
    %902 = vmatprep.subr.mxu0 0.0
    %903 = vmatpush1.msra.mxu0 0.0
    %904 = vmatprep.subr.mxu0 0.0
    %905 = vmatpush1.msra.mxu0 0.0
    %906 = vmatprep.subr.mxu0 0.0
    %907 = vmatpush1.msra.mxu0 0.0
    %908 = vmatprep.subr.mxu0 0.0
    %909 = vmatpush1.msra.mxu0 0.0
    %910 = vmatprep.subr.mxu0 0.0
    %911 = vmatpush1.msra.mxu0 0.0
    %912 = vmatprep.subr.mxu0 0.0
    %913 = vmatpush1.msra.mxu0 0.0
    %914 = vmatprep.subr.mxu0 0.0
    %915 = vmatpush1.msra.mxu0 0.0
    %916 = vmatprep.subr.mxu0 0.0
    %917 = vmatpush1.msra.mxu0 0.0
    %918 = vmatprep.subr.mxu0 0.0
    %919 = vmatpush1.msra.mxu0 0.0
    %920 = vmatprep.subr.mxu0 0.0
    %921 = vmatpush1.msra.mxu0 0.0
    %922 = vmatprep.subr.mxu0 0.0
    %923 = vmatpush1.msra.mxu0 0.0
    %924 = vmatprep.subr.mxu0 0.0
    %925 = vmatpush1.msra.mxu0 0.0
    %926 = vmatprep.subr.mxu0 0.0
    %927 = vmatpush1.msra.mxu0 0.0
    %928 = vmatprep.subr.mxu0 0.0
    %929 = vmatpush1.msra.mxu0 0.0
    %930 = vmatprep.subr.mxu0 0.0
    %931 = vmatpush1.msra.mxu0 0.0
    %932 = vmatprep.subr.mxu0 0.0
    %933 = vmatpush1.msra.mxu0 0.0
    %934 = vmatprep.subr.mxu0 0.0
    %935 = vmatpush1.msra.mxu0 0.0
    %936 = vmatprep.subr.mxu0 0.0
    %937 = vmatpush1.msra.mxu0 0.0
    %938 = vmatprep.subr.mxu0 0.0
    %939 = vmatpush1.msra.mxu0 0.0
    %940 = vmatprep.subr.mxu0 0.0
    %941 = vmatpush1.msra.mxu0 0.0
    %942 = vmatprep.subr.mxu0 0.0
    %943 = vmatpush1.msra.mxu0 0.0
    %944 = vmatprep.mubr.f32.mxu0 0.0
    %945 = vmatmul.mubr.f32.gmra.mrb[0].mxu0 %v374
    %v946 = vpop.f32.mrb[0].mxu0
    %v947 = vadd.f32 0.0, %v946
    %v948 = vpop.f32.mrb[0].mxu0
    %949 = vdwg.mxu0
    %v950 = vld [vmem:[#allocation2 + $0x400] sm:$0xff]
    %v951 = vld [vmem:[#allocation2 + $0x408] sm:$0xff]
    %v952 = vld [vmem:[#allocation2 + $0x410] sm:$0xff]
    %v953 = vld [vmem:[#allocation2 + $0x418] sm:$0xff]
    %v954 = vld [vmem:[#allocation2 + $0x420] sm:$0xff]
    %v955 = vld [vmem:[#allocation2 + $0x428] sm:$0xff]
    %v956 = vld [vmem:[#allocation2 + $0x430] sm:$0xff]
    %v957 = vld [vmem:[#allocation2 + $0x438] sm:$0xff]
    %v958 = vld [vmem:[#allocation2 + $0x440] sm:$0xff]
    %v959 = vld [vmem:[#allocation2 + $0x448] sm:$0xff]
    %v960 = vld [vmem:[#allocation2 + $0x450] sm:$0xff]
    %v961 = vld [vmem:[#allocation2 + $0x458] sm:$0xff]
    %v962 = vld [vmem:[#allocation2 + $0x460] sm:$0xff]
    %v963 = vld [vmem:[#allocation2 + $0x468] sm:$0xff]
    %v964 = vld [vmem:[#allocation2 + $0x470] sm:$0xff]
    %v965 = vld [vmem:[#allocation2 + $0x478] sm:$0xff]
    %v966 = vld [vmem:[#allocation2 + $0x480] sm:$0xff]
    %v967 = vld [vmem:[#allocation2 + $0x488] sm:$0xff]
    %v968 = vld [vmem:[#allocation2 + $0x490] sm:$0xff]
    %v969 = vld [vmem:[#allocation2 + $0x498] sm:$0xff]
    %v970 = vld [vmem:[#allocation2 + $0x4a0] sm:$0xff]
    %v971 = vld [vmem:[#allocation2 + $0x4a8] sm:$0xff]
    %v972 = vld [vmem:[#allocation2 + $0x4b0] sm:$0xff]
    %v973 = vld [vmem:[#allocation2 + $0x4b8] sm:$0xff]
    %v974 = vld [vmem:[#allocation2 + $0x4c0] sm:$0xff]
    %v975 = vld [vmem:[#allocation2 + $0x4c8] sm:$0xff]
    %v976 = vld [vmem:[#allocation2 + $0x4d0] sm:$0xff]
    %v977 = vld [vmem:[#allocation2 + $0x4d8] sm:$0xff]
    %v978 = vld [vmem:[#allocation2 + $0x4e0] sm:$0xff]
    %v979 = vld [vmem:[#allocation2 + $0x4e8] sm:$0xff]
    %v980 = vld [vmem:[#allocation2 + $0x4f0] sm:$0xff]
    %v981 = vld [vmem:[#allocation2 + $0x4f8] sm:$0xff]
    %v982 = vld [vmem:[%s3 + $0x18] sm:$0xff]
    %983 = vmatprep.subr.mxu0 0.0
    %984 = vmatpush1.msra.mxu0 %v950
    %985 = vmatprep.subr.mxu0 0.0
    %986 = vmatpush1.msra.mxu0 %v951
    %987 = vmatprep.subr.mxu0 0.0
    %988 = vmatpush1.msra.mxu0 %v952
    %989 = vmatprep.subr.mxu0 0.0
    %990 = vmatpush1.msra.mxu0 %v953
    %991 = vmatprep.subr.mxu0 0.0
    %992 = vmatpush1.msra.mxu0 %v954
    %993 = vmatprep.subr.mxu0 0.0
    %994 = vmatpush1.msra.mxu0 %v955
    %995 = vmatprep.subr.mxu0 0.0
    %996 = vmatpush1.msra.mxu0 %v956
    %997 = vmatprep.subr.mxu0 0.0
    %998 = vmatpush1.msra.mxu0 %v957
    %999 = vmatprep.subr.mxu0 0.0
    %1000 = vmatpush1.msra.mxu0 %v958
    %1001 = vmatprep.subr.mxu0 0.0
    %1002 = vmatpush1.msra.mxu0 %v959
    %1003 = vmatprep.subr.mxu0 0.0
    %1004 = vmatpush1.msra.mxu0 %v960
    %1005 = vmatprep.subr.mxu0 0.0
    %1006 = vmatpush1.msra.mxu0 %v961
    %1007 = vmatprep.subr.mxu0 0.0
    %1008 = vmatpush1.msra.mxu0 %v962
    %1009 = vmatprep.subr.mxu0 0.0
    %1010 = vmatpush1.msra.mxu0 %v963
    %1011 = vmatprep.subr.mxu0 0.0
    %1012 = vmatpush1.msra.mxu0 %v964
    %1013 = vmatprep.subr.mxu0 0.0
    %1014 = vmatpush1.msra.mxu0 %v965
    %1015 = vmatprep.subr.mxu0 0.0
    %1016 = vmatpush1.msra.mxu0 %v966
    %1017 = vmatprep.subr.mxu0 0.0
    %1018 = vmatpush1.msra.mxu0 %v967
    %1019 = vmatprep.subr.mxu0 0.0
    %1020 = vmatpush1.msra.mxu0 %v968
    %1021 = vmatprep.subr.mxu0 0.0
    %1022 = vmatpush1.msra.mxu0 %v969
    %1023 = vmatprep.subr.mxu0 0.0
    %1024 = vmatpush1.msra.mxu0 %v970
    %1025 = vmatprep.subr.mxu0 0.0
    %1026 = vmatpush1.msra.mxu0 %v971
    %1027 = vmatprep.subr.mxu0 0.0
    %1028 = vmatpush1.msra.mxu0 %v972
    %1029 = vmatprep.subr.mxu0 0.0
    %1030 = vmatpush1.msra.mxu0 %v973
    %1031 = vmatprep.subr.mxu0 0.0
    %1032 = vmatpush1.msra.mxu0 %v974
    %1033 = vmatprep.subr.mxu0 0.0
    %1034 = vmatpush1.msra.mxu0 %v975
    %1035 = vmatprep.subr.mxu0 0.0
    %1036 = vmatpush1.msra.mxu0 %v976
    %1037 = vmatprep.subr.mxu0 0.0
    %1038 = vmatpush1.msra.mxu0 %v977
    %1039 = vmatprep.subr.mxu0 0.0
    %1040 = vmatpush1.msra.mxu0 %v978
    %1041 = vmatprep.subr.mxu0 0.0
    %1042 = vmatpush1.msra.mxu0 %v979
    %1043 = vmatprep.subr.mxu0 0.0
    %1044 = vmatpush1.msra.mxu0 %v980
    %1045 = vmatprep.subr.mxu0 0.0
    %1046 = vmatpush1.msra.mxu0 %v981
    %1047 = vmatprep.mubr.f32.mxu0 %v549
    %1048 = vmatmul.mubr.f32.gmra.mrb[0].mxu0 %v947
    %v1049 = vpop.f32.mrb[0].mxu0
    %v1050 = vadd.f32 %v982, %v1049
    %v1051 = vpop.f32.mrb[0].mxu0
    %1052 = vdwg.mxu0
    %v1053 = vmax.f32 %v1050, 0.0
    %1054 = vmatprep.subr.mxu0 0.0
    %1055 = vmatpush1.msra.mxu0 %v879
    %1056 = vmatprep.subr.mxu0 0.0
    %1057 = vmatpush1.msra.mxu0 0.0
    %1058 = vmatprep.subr.mxu0 0.0
    %1059 = vmatpush1.msra.mxu0 0.0
    %1060 = vmatprep.subr.mxu0 0.0
    %1061 = vmatpush1.msra.mxu0 0.0
    %1062 = vmatprep.subr.mxu0 0.0
    %1063 = vmatpush1.msra.mxu0 0.0
    %1064 = vmatprep.subr.mxu0 0.0
    %1065 = vmatpush1.msra.mxu0 0.0
    %1066 = vmatprep.subr.mxu0 0.0
    %1067 = vmatpush1.msra.mxu0 0.0
    %1068 = vmatprep.subr.mxu0 0.0
    %1069 = vmatpush1.msra.mxu0 0.0
    %1070 = vmatprep.subr.mxu0 0.0
    %1071 = vmatpush1.msra.mxu0 0.0
    %1072 = vmatprep.subr.mxu0 0.0
    %1073 = vmatpush1.msra.mxu0 0.0
    %1074 = vmatprep.subr.mxu0 0.0
    %1075 = vmatpush1.msra.mxu0 0.0
    %1076 = vmatprep.subr.mxu0 0.0
    %1077 = vmatpush1.msra.mxu0 0.0
    %1078 = vmatprep.subr.mxu0 0.0
    %1079 = vmatpush1.msra.mxu0 0.0
    %1080 = vmatprep.subr.mxu0 0.0
    %1081 = vmatpush1.msra.mxu0 0.0
    %1082 = vmatprep.subr.mxu0 0.0
    %1083 = vmatpush1.msra.mxu0 0.0
    %1084 = vmatprep.subr.mxu0 0.0
    %1085 = vmatpush1.msra.mxu0 0.0
    %1086 = vmatprep.subr.mxu0 0.0
    %1087 = vmatpush1.msra.mxu0 0.0
    %1088 = vmatprep.subr.mxu0 0.0
    %1089 = vmatpush1.msra.mxu0 0.0
    %1090 = vmatprep.subr.mxu0 0.0
    %1091 = vmatpush1.msra.mxu0 0.0
    %1092 = vmatprep.subr.mxu0 0.0
    %1093 = vmatpush1.msra.mxu0 0.0
    %1094 = vmatprep.subr.mxu0 0.0
    %1095 = vmatpush1.msra.mxu0 0.0
    %1096 = vmatprep.subr.mxu0 0.0
    %1097 = vmatpush1.msra.mxu0 0.0
    %1098 = vmatprep.subr.mxu0 0.0
    %1099 = vmatpush1.msra.mxu0 0.0
    %1100 = vmatprep.subr.mxu0 0.0
    %1101 = vmatpush1.msra.mxu0 0.0
    %1102 = vmatprep.subr.mxu0 0.0
    %1103 = vmatpush1.msra.mxu0 0.0
    %1104 = vmatprep.subr.mxu0 0.0
    %1105 = vmatpush1.msra.mxu0 0.0
    %1106 = vmatprep.subr.mxu0 0.0
    %1107 = vmatpush1.msra.mxu0 0.0
    %1108 = vmatprep.subr.mxu0 0.0
    %1109 = vmatpush1.msra.mxu0 0.0
    %1110 = vmatprep.subr.mxu0 0.0
    %1111 = vmatpush1.msra.mxu0 0.0
    %1112 = vmatprep.subr.mxu0 0.0
    %1113 = vmatpush1.msra.mxu0 0.0
    %1114 = vmatprep.subr.mxu0 0.0
    %1115 = vmatpush1.msra.mxu0 0.0
    %1116 = vmatprep.subr.mxu0 0.0
    %1117 = vmatpush1.msra.mxu0 0.0
    %1118 = vmatprep.mubr.f32.mxu0 0.0
    %1119 = vmatmul.mubr.f32.gmra.mrb[0].mxu0 %v38
    %v1120 = vpop.f32.mrb[0].mxu0
    %v1121 = vadd.f32 0.0, %v1120
    %v1122 = vpop.f32.mrb[0].mxu0
    %1123 = vdwg.mxu0
    %1124 = vmatprep.subr.mxu0 0.0
    %1125 = vmatpush1.msra.mxu0 %v1053
    %1126 = vmatprep.subr.mxu0 0.0
    %1127 = vmatpush1.msra.mxu0 0.0
    %1128 = vmatprep.subr.mxu0 0.0
    %1129 = vmatpush1.msra.mxu0 0.0
    %1130 = vmatprep.subr.mxu0 0.0
    %1131 = vmatpush1.msra.mxu0 0.0
    %1132 = vmatprep.subr.mxu0 0.0
    %1133 = vmatpush1.msra.mxu0 0.0
    %1134 = vmatprep.subr.mxu0 0.0
    %1135 = vmatpush1.msra.mxu0 0.0
    %1136 = vmatprep.subr.mxu0 0.0
    %1137 = vmatpush1.msra.mxu0 0.0
    %1138 = vmatprep.subr.mxu0 0.0
    %1139 = vmatpush1.msra.mxu0 0.0
    %1140 = vmatprep.subr.mxu0 0.0
    %1141 = vmatpush1.msra.mxu0 0.0
    %1142 = vmatprep.subr.mxu0 0.0
    %1143 = vmatpush1.msra.mxu0 0.0
    %1144 = vmatprep.subr.mxu0 0.0
    %1145 = vmatpush1.msra.mxu0 0.0
    %1146 = vmatprep.subr.mxu0 0.0
    %1147 = vmatpush1.msra.mxu0 0.0
    %1148 = vmatprep.subr.mxu0 0.0
    %1149 = vmatpush1.msra.mxu0 0.0
    %1150 = vmatprep.subr.mxu0 0.0
    %1151 = vmatpush1.msra.mxu0 0.0
    %1152 = vmatprep.subr.mxu0 0.0
    %1153 = vmatpush1.msra.mxu0 0.0
    %1154 = vmatprep.subr.mxu0 0.0
    %1155 = vmatpush1.msra.mxu0 0.0
    %1156 = vmatprep.subr.mxu0 0.0
    %1157 = vmatpush1.msra.mxu0 0.0
    %1158 = vmatprep.subr.mxu0 0.0
    %1159 = vmatpush1.msra.mxu0 0.0
    %1160 = vmatprep.subr.mxu0 0.0
    %1161 = vmatpush1.msra.mxu0 0.0
    %1162 = vmatprep.subr.mxu0 0.0
    %1163 = vmatpush1.msra.mxu0 0.0
    %1164 = vmatprep.subr.mxu0 0.0
    %1165 = vmatpush1.msra.mxu0 0.0
    %1166 = vmatprep.subr.mxu0 0.0
    %1167 = vmatpush1.msra.mxu0 0.0
    %1168 = vmatprep.subr.mxu0 0.0
    %1169 = vmatpush1.msra.mxu0 0.0
    %1170 = vmatprep.subr.mxu0 0.0
    %1171 = vmatpush1.msra.mxu0 0.0
    %1172 = vmatprep.subr.mxu0 0.0
    %1173 = vmatpush1.msra.mxu0 0.0
    %1174 = vmatprep.subr.mxu0 0.0
    %1175 = vmatpush1.msra.mxu0 0.0
    %1176 = vmatprep.subr.mxu0 0.0
    %1177 = vmatpush1.msra.mxu0 0.0
    %1178 = vmatprep.subr.mxu0 0.0
    %1179 = vmatpush1.msra.mxu0 0.0
    %1180 = vmatprep.subr.mxu0 0.0
    %1181 = vmatpush1.msra.mxu0 0.0
    %1182 = vmatprep.subr.mxu0 0.0
    %1183 = vmatpush1.msra.mxu0 0.0
    %1184 = vmatprep.subr.mxu0 0.0
    %1185 = vmatpush1.msra.mxu0 0.0
    %1186 = vmatprep.subr.mxu0 0.0
    %1187 = vmatpush1.msra.mxu0 0.0
    %1188 = vmatprep.mubr.f32.mxu0 0.0
    %1189 = vmatmul.mubr.f32.gmra.mrb[0].mxu0 %v111
    %v1190 = vpop.f32.mrb[0].mxu0
    %v1191 = vadd.f32 0.0, %v1190
    %v1192 = vpop.f32.mrb[0].mxu0
    %1193 = vdwg.mxu0
    %v1194 = vld [vmem:[#allocation2 + $0x500] sm:$0xff]
    %v1195 = vld [vmem:[#allocation2 + $0x508] sm:$0xff]
    %v1196 = vld [vmem:[#allocation2 + $0x510] sm:$0xff]
    %v1197 = vld [vmem:[#allocation2 + $0x518] sm:$0xff]
    %v1198 = vld [vmem:[#allocation2 + $0x520] sm:$0xff]
    %v1199 = vld [vmem:[#allocation2 + $0x528] sm:$0xff]
    %v1200 = vld [vmem:[#allocation2 + $0x530] sm:$0xff]
    %v1201 = vld [vmem:[#allocation2 + $0x538] sm:$0xff]
    %v1202 = vld [vmem:[#allocation2 + $0x540] sm:$0xff]
    %v1203 = vld [vmem:[#allocation2 + $0x548] sm:$0xff]
    %v1204 = vld [vmem:[#allocation2 + $0x550] sm:$0xff]
    %v1205 = vld [vmem:[#allocation2 + $0x558] sm:$0xff]
    %v1206 = vld [vmem:[#allocation2 + $0x560] sm:$0xff]
    %v1207 = vld [vmem:[#allocation2 + $0x568] sm:$0xff]
    %v1208 = vld [vmem:[#allocation2 + $0x570] sm:$0xff]
    %v1209 = vld [vmem:[#allocation2 + $0x578] sm:$0xff]
    %v1210 = vld [vmem:[#allocation2 + $0x580] sm:$0xff]
    %v1211 = vld [vmem:[#allocation2 + $0x588] sm:$0xff]
    %v1212 = vld [vmem:[#allocation2 + $0x590] sm:$0xff]
    %v1213 = vld [vmem:[#allocation2 + $0x598] sm:$0xff]
    %v1214 = vld [vmem:[#allocation2 + $0x5a0] sm:$0xff]
    %v1215 = vld [vmem:[#allocation2 + $0x5a8] sm:$0xff]
    %v1216 = vld [vmem:[#allocation2 + $0x5b0] sm:$0xff]
    %v1217 = vld [vmem:[#allocation2 + $0x5b8] sm:$0xff]
    %v1218 = vld [vmem:[#allocation2 + $0x5c0] sm:$0xff]
    %v1219 = vld [vmem:[#allocation2 + $0x5c8] sm:$0xff]
    %v1220 = vld [vmem:[#allocation2 + $0x5d0] sm:$0xff]
    %v1221 = vld [vmem:[#allocation2 + $0x5d8] sm:$0xff]
    %v1222 = vld [vmem:[#allocation2 + $0x5e0] sm:$0xff]
    %v1223 = vld [vmem:[#allocation2 + $0x5e8] sm:$0xff]
    %v1224 = vld [vmem:[#allocation2 + $0x5f0] sm:$0xff]
    %v1225 = vld [vmem:[#allocation2 + $0x5f8] sm:$0xff]
    %v1226 = vld [vmem:[#allocation2 + $0x600] sm:$0xff]
    %v1227 = vld [vmem:[#allocation2 + $0x608] sm:$0xff]
    %v1228 = vld [vmem:[#allocation2 + $0x610] sm:$0xff]
    %v1229 = vld [vmem:[#allocation2 + $0x618] sm:$0xff]
    %v1230 = vld [vmem:[#allocation2 + $0x620] sm:$0xff]
    %v1231 = vld [vmem:[#allocation2 + $0x628] sm:$0xff]
    %v1232 = vld [vmem:[#allocation2 + $0x630] sm:$0xff]
    %v1233 = vld [vmem:[#allocation2 + $0x638] sm:$0xff]
    %v1234 = vld [vmem:[#allocation2 + $0x640] sm:$0xff]
    %v1235 = vld [vmem:[#allocation2 + $0x648] sm:$0xff]
    %v1236 = vld [vmem:[#allocation2 + $0x650] sm:$0xff]
    %v1237 = vld [vmem:[#allocation2 + $0x658] sm:$0xff]
    %v1238 = vld [vmem:[#allocation2 + $0x660] sm:$0xff]
    %v1239 = vld [vmem:[#allocation2 + $0x668] sm:$0xff]
    %v1240 = vld [vmem:[#allocation2 + $0x670] sm:$0xff]
    %v1241 = vld [vmem:[#allocation2 + $0x678] sm:$0xff]
    %v1242 = vld [vmem:[%s3 + $0x20] sm:$0xff]
    %1243 = vmatprep.subr.mxu0 0.0
    %1244 = vmatpush1.msra.mxu0 %v1194
    %1245 = vmatprep.subr.mxu0 0.0
    %1246 = vmatpush1.msra.mxu0 %v1195
    %1247 = vmatprep.subr.mxu0 0.0
    %1248 = vmatpush1.msra.mxu0 %v1196
    %1249 = vmatprep.subr.mxu0 0.0
    %1250 = vmatpush1.msra.mxu0 %v1197
    %1251 = vmatprep.subr.mxu0 0.0
    %1252 = vmatpush1.msra.mxu0 %v1198
    %1253 = vmatprep.subr.mxu0 0.0
    %1254 = vmatpush1.msra.mxu0 %v1199
    %1255 = vmatprep.subr.mxu0 0.0
    %1256 = vmatpush1.msra.mxu0 %v1200
    %1257 = vmatprep.subr.mxu0 0.0
    %1258 = vmatpush1.msra.mxu0 %v1201
    %1259 = vmatprep.subr.mxu0 0.0
    %1260 = vmatpush1.msra.mxu0 %v1202
    %1261 = vmatprep.subr.mxu0 0.0
    %1262 = vmatpush1.msra.mxu0 %v1203
    %1263 = vmatprep.subr.mxu0 0.0
    %1264 = vmatpush1.msra.mxu0 %v1204
    %1265 = vmatprep.subr.mxu0 0.0
    %1266 = vmatpush1.msra.mxu0 %v1205
    %1267 = vmatprep.subr.mxu0 0.0
    %1268 = vmatpush1.msra.mxu0 %v1206
    %1269 = vmatprep.subr.mxu0 0.0
    %1270 = vmatpush1.msra.mxu0 %v1207
    %1271 = vmatprep.subr.mxu0 0.0
    %1272 = vmatpush1.msra.mxu0 %v1208
    %1273 = vmatprep.subr.mxu0 0.0
    %1274 = vmatpush1.msra.mxu0 %v1209
    %1275 = vmatprep.subr.mxu0 0.0
    %1276 = vmatpush1.msra.mxu0 %v1210
    %1277 = vmatprep.subr.mxu0 0.0
    %1278 = vmatpush1.msra.mxu0 %v1211
    %1279 = vmatprep.subr.mxu0 0.0
    %1280 = vmatpush1.msra.mxu0 %v1212
    %1281 = vmatprep.subr.mxu0 0.0
    %1282 = vmatpush1.msra.mxu0 %v1213
    %1283 = vmatprep.subr.mxu0 0.0
    %1284 = vmatpush1.msra.mxu0 %v1214
    %1285 = vmatprep.subr.mxu0 0.0
    %1286 = vmatpush1.msra.mxu0 %v1215
    %1287 = vmatprep.subr.mxu0 0.0
    %1288 = vmatpush1.msra.mxu0 %v1216
    %1289 = vmatprep.subr.mxu0 0.0
    %1290 = vmatpush1.msra.mxu0 %v1217
    %1291 = vmatprep.subr.mxu0 0.0
    %1292 = vmatpush1.msra.mxu0 %v1218
    %1293 = vmatprep.subr.mxu0 0.0
    %1294 = vmatpush1.msra.mxu0 %v1219
    %1295 = vmatprep.subr.mxu0 0.0
    %1296 = vmatpush1.msra.mxu0 %v1220
    %1297 = vmatprep.subr.mxu0 0.0
    %1298 = vmatpush1.msra.mxu0 %v1221
    %1299 = vmatprep.subr.mxu0 0.0
    %1300 = vmatpush1.msra.mxu0 %v1222
    %1301 = vmatprep.subr.mxu0 0.0
    %1302 = vmatpush1.msra.mxu0 %v1223
    %1303 = vmatprep.subr.mxu0 0.0
    %1304 = vmatpush1.msra.mxu0 %v1224
    %1305 = vmatprep.subr.mxu0 0.0
    %1306 = vmatpush1.msra.mxu0 %v1225
    %1307 = vmatprep.mubr.f32.mxu0 %v1191
    %1308 = vmatmul.mubr.f32.gmra.mrb[0].mxu0 %v1121
    %v1309 = vpop.f32.mrb[0].mxu0
    %v1310 = vadd.f32 %v1242, %v1309
    %v1311 = vpop.f32.mrb[0].mxu0
    %1312 = vdwg.mxu0
    %1313 = vmatprep.subr.mxu0 0.0
    %1314 = vmatpush1.msra.mxu0 %v1226
    %1315 = vmatprep.subr.mxu0 0.0
    %1316 = vmatpush1.msra.mxu0 %v1227
    %1317 = vmatprep.subr.mxu0 0.0
    %1318 = vmatpush1.msra.mxu0 %v1228
    %1319 = vmatprep.subr.mxu0 0.0
    %1320 = vmatpush1.msra.mxu0 %v1229
    %1321 = vmatprep.subr.mxu0 0.0
    %1322 = vmatpush1.msra.mxu0 %v1230
    %1323 = vmatprep.subr.mxu0 0.0
    %1324 = vmatpush1.msra.mxu0 %v1231
    %1325 = vmatprep.subr.mxu0 0.0
    %1326 = vmatpush1.msra.mxu0 %v1232
    %1327 = vmatprep.subr.mxu0 0.0
    %1328 = vmatpush1.msra.mxu0 %v1233
    %1329 = vmatprep.subr.mxu0 0.0
    %1330 = vmatpush1.msra.mxu0 %v1234
    %1331 = vmatprep.subr.mxu0 0.0
    %1332 = vmatpush1.msra.mxu0 %v1235
    %1333 = vmatprep.subr.mxu0 0.0
    %1334 = vmatpush1.msra.mxu0 %v1236
    %1335 = vmatprep.subr.mxu0 0.0
    %1336 = vmatpush1.msra.mxu0 %v1237
    %1337 = vmatprep.subr.mxu0 0.0
    %1338 = vmatpush1.msra.mxu0 %v1238
    %1339 = vmatprep.subr.mxu0 0.0
    %1340 = vmatpush1.msra.mxu0 %v1239
    %1341 = vmatprep.subr.mxu0 0.0
    %1342 = vmatpush1.msra.mxu0 %v1240
    %1343 = vmatprep.subr.mxu0 0.0
    %1344 = vmatpush1.msra.mxu0 %v1241
    %1345 = vmatprep.subr.mxu0 0.0
    %1346 = vmatpush1.msra.mxu0 0.0
    %1347 = vmatprep.subr.mxu0 0.0
    %1348 = vmatpush1.msra.mxu0 0.0
    %1349 = vmatprep.subr.mxu0 0.0
    %1350 = vmatpush1.msra.mxu0 0.0
    %1351 = vmatprep.subr.mxu0 0.0
    %1352 = vmatpush1.msra.mxu0 0.0
    %1353 = vmatprep.subr.mxu0 0.0
    %1354 = vmatpush1.msra.mxu0 0.0
    %1355 = vmatprep.subr.mxu0 0.0
    %1356 = vmatpush1.msra.mxu0 0.0
    %1357 = vmatprep.subr.mxu0 0.0
    %1358 = vmatpush1.msra.mxu0 0.0
    %1359 = vmatprep.subr.mxu0 0.0
    %1360 = vmatpush1.msra.mxu0 0.0
    %1361 = vmatprep.subr.mxu0 0.0
    %1362 = vmatpush1.msra.mxu0 0.0
    %1363 = vmatprep.subr.mxu0 0.0
    %1364 = vmatpush1.msra.mxu0 0.0
    %1365 = vmatprep.subr.mxu0 0.0
    %1366 = vmatpush1.msra.mxu0 0.0
    %1367 = vmatprep.subr.mxu0 0.0
    %1368 = vmatpush1.msra.mxu0 0.0
    %1369 = vmatprep.subr.mxu0 0.0
    %1370 = vmatpush1.msra.mxu0 0.0
    %1371 = vmatprep.subr.mxu0 0.0
    %1372 = vmatpush1.msra.mxu0 0.0
    %1373 = vmatprep.subr.mxu0 0.0
    %1374 = vmatpush1.msra.mxu0 0.0
    %1375 = vmatprep.subr.mxu0 0.0
    %1376 = vmatpush1.msra.mxu0 0.0
    %1377 = vmatprep.mubr.f32.mxu0 0.0
    %1378 = vmatmul.mubr.f32.gmra.mrb[0].mxu0 %v879
    %v1379 = vpop.f32.mrb[0].mxu0
    %v1380 = vadd.f32 %v1310, %v1379
    %v1381 = vpop.f32.mrb[0].mxu0
    %1382 = vdwg.mxu0
    %1383 = vmatprep.subr.mxu0 0.0
    %1384 = vmatpush1.msra.mxu0 %v879
    %1385 = vmatprep.subr.mxu0 0.0
    %1386 = vmatpush1.msra.mxu0 0.0
    %1387 = vmatprep.subr.mxu0 0.0
    %1388 = vmatpush1.msra.mxu0 0.0
    %1389 = vmatprep.subr.mxu0 0.0
    %1390 = vmatpush1.msra.mxu0 0.0
    %1391 = vmatprep.subr.mxu0 0.0
    %1392 = vmatpush1.msra.mxu0 0.0
    %1393 = vmatprep.subr.mxu0 0.0
    %1394 = vmatpush1.msra.mxu0 0.0
    %1395 = vmatprep.subr.mxu0 0.0
    %1396 = vmatpush1.msra.mxu0 0.0
    %1397 = vmatprep.subr.mxu0 0.0
    %1398 = vmatpush1.msra.mxu0 0.0
    %1399 = vmatprep.subr.mxu0 0.0
    %1400 = vmatpush1.msra.mxu0 0.0
    %1401 = vmatprep.subr.mxu0 0.0
    %1402 = vmatpush1.msra.mxu0 0.0
    %1403 = vmatprep.subr.mxu0 0.0
    %1404 = vmatpush1.msra.mxu0 0.0
    %1405 = vmatprep.subr.mxu0 0.0
    %1406 = vmatpush1.msra.mxu0 0.0
    %1407 = vmatprep.subr.mxu0 0.0
    %1408 = vmatpush1.msra.mxu0 0.0
    %1409 = vmatprep.subr.mxu0 0.0
    %1410 = vmatpush1.msra.mxu0 0.0
    %1411 = vmatprep.subr.mxu0 0.0
    %1412 = vmatpush1.msra.mxu0 0.0
    %1413 = vmatprep.subr.mxu0 0.0
    %1414 = vmatpush1.msra.mxu0 0.0
    %1415 = vmatprep.subr.mxu0 0.0
    %1416 = vmatpush1.msra.mxu0 0.0
    %1417 = vmatprep.subr.mxu0 0.0
    %1418 = vmatpush1.msra.mxu0 0.0
    %1419 = vmatprep.subr.mxu0 0.0
    %1420 = vmatpush1.msra.mxu0 0.0
    %1421 = vmatprep.subr.mxu0 0.0
    %1422 = vmatpush1.msra.mxu0 0.0
    %1423 = vmatprep.subr.mxu0 0.0
    %1424 = vmatpush1.msra.mxu0 0.0
    %1425 = vmatprep.subr.mxu0 0.0
    %1426 = vmatpush1.msra.mxu0 0.0
    %1427 = vmatprep.subr.mxu0 0.0
    %1428 = vmatpush1.msra.mxu0 0.0
    %1429 = vmatprep.subr.mxu0 0.0
    %1430 = vmatpush1.msra.mxu0 0.0
    %1431 = vmatprep.subr.mxu0 0.0
    %1432 = vmatpush1.msra.mxu0 0.0
    %1433 = vmatprep.subr.mxu0 0.0
    %1434 = vmatpush1.msra.mxu0 0.0
    %1435 = vmatprep.subr.mxu0 0.0
    %1436 = vmatpush1.msra.mxu0 0.0
    %1437 = vmatprep.subr.mxu0 0.0
    %1438 = vmatpush1.msra.mxu0 0.0
    %1439 = vmatprep.subr.mxu0 0.0
    %1440 = vmatpush1.msra.mxu0 0.0
    %1441 = vmatprep.subr.mxu0 0.0
    %1442 = vmatpush1.msra.mxu0 0.0
    %1443 = vmatprep.subr.mxu0 0.0
    %1444 = vmatpush1.msra.mxu0 0.0
    %1445 = vmatprep.subr.mxu0 0.0
    %1446 = vmatpush1.msra.mxu0 0.0
    %1447 = vmatprep.mubr.f32.mxu0 0.0
    %1448 = vmatmul.mubr.f32.gmra.mrb[0].mxu0 %v374
    %v1449 = vpop.f32.mrb[0].mxu0
    %v1450 = vadd.f32 0.0, %v1449
    %v1451 = vpop.f32.mrb[0].mxu0
    %1452 = vdwg.mxu0
    %v1453 = vld [vmem:[#allocation2 + $0x680] sm:$0xff]
    %v1454 = vld [vmem:[#allocation2 + $0x688] sm:$0xff]
    %v1455 = vld [vmem:[#allocation2 + $0x690] sm:$0xff]
    %v1456 = vld [vmem:[#allocation2 + $0x698] sm:$0xff]
    %v1457 = vld [vmem:[#allocation2 + $0x6a0] sm:$0xff]
    %v1458 = vld [vmem:[#allocation2 + $0x6a8] sm:$0xff]
    %v1459 = vld [vmem:[#allocation2 + $0x6b0] sm:$0xff]
    %v1460 = vld [vmem:[#allocation2 + $0x6b8] sm:$0xff]
    %v1461 = vld [vmem:[#allocation2 + $0x6c0] sm:$0xff]
    %v1462 = vld [vmem:[#allocation2 + $0x6c8] sm:$0xff]
    %v1463 = vld [vmem:[#allocation2 + $0x6d0] sm:$0xff]
    %v1464 = vld [vmem:[#allocation2 + $0x6d8] sm:$0xff]
    %v1465 = vld [vmem:[#allocation2 + $0x6e0] sm:$0xff]
    %v1466 = vld [vmem:[#allocation2 + $0x6e8] sm:$0xff]
    %v1467 = vld [vmem:[#allocation2 + $0x6f0] sm:$0xff]
    %v1468 = vld [vmem:[#allocation2 + $0x6f8] sm:$0xff]
    %v1469 = vld [vmem:[#allocation2 + $0x700] sm:$0xff]
    %v1470 = vld [vmem:[#allocation2 + $0x708] sm:$0xff]
    %v1471 = vld [vmem:[#allocation2 + $0x710] sm:$0xff]
    %v1472 = vld [vmem:[#allocation2 + $0x718] sm:$0xff]
    %v1473 = vld [vmem:[#allocation2 + $0x720] sm:$0xff]
    %v1474 = vld [vmem:[#allocation2 + $0x728] sm:$0xff]
    %v1475 = vld [vmem:[#allocation2 + $0x730] sm:$0xff]
    %v1476 = vld [vmem:[#allocation2 + $0x738] sm:$0xff]
    %v1477 = vld [vmem:[#allocation2 + $0x740] sm:$0xff]
    %v1478 = vld [vmem:[#allocation2 + $0x748] sm:$0xff]
    %v1479 = vld [vmem:[#allocation2 + $0x750] sm:$0xff]
    %v1480 = vld [vmem:[#allocation2 + $0x758] sm:$0xff]
    %v1481 = vld [vmem:[#allocation2 + $0x760] sm:$0xff]
    %v1482 = vld [vmem:[#allocation2 + $0x768] sm:$0xff]
    %v1483 = vld [vmem:[#allocation2 + $0x770] sm:$0xff]
    %v1484 = vld [vmem:[#allocation2 + $0x778] sm:$0xff]
    %v1485 = vld [vmem:[%s3 + $0x28] sm:$0xff]
    %1486 = vmatprep.subr.mxu0 0.0
    %1487 = vmatpush1.msra.mxu0 %v1453
    %1488 = vmatprep.subr.mxu0 0.0
    %1489 = vmatpush1.msra.mxu0 %v1454
    %1490 = vmatprep.subr.mxu0 0.0
    %1491 = vmatpush1.msra.mxu0 %v1455
    %1492 = vmatprep.subr.mxu0 0.0
    %1493 = vmatpush1.msra.mxu0 %v1456
    %1494 = vmatprep.subr.mxu0 0.0
    %1495 = vmatpush1.msra.mxu0 %v1457
    %1496 = vmatprep.subr.mxu0 0.0
    %1497 = vmatpush1.msra.mxu0 %v1458
    %1498 = vmatprep.subr.mxu0 0.0
    %1499 = vmatpush1.msra.mxu0 %v1459
    %1500 = vmatprep.subr.mxu0 0.0
    %1501 = vmatpush1.msra.mxu0 %v1460
    %1502 = vmatprep.subr.mxu0 0.0
    %1503 = vmatpush1.msra.mxu0 %v1461
    %1504 = vmatprep.subr.mxu0 0.0
    %1505 = vmatpush1.msra.mxu0 %v1462
    %1506 = vmatprep.subr.mxu0 0.0
    %1507 = vmatpush1.msra.mxu0 %v1463
    %1508 = vmatprep.subr.mxu0 0.0
    %1509 = vmatpush1.msra.mxu0 %v1464
    %1510 = vmatprep.subr.mxu0 0.0
    %1511 = vmatpush1.msra.mxu0 %v1465
    %1512 = vmatprep.subr.mxu0 0.0
    %1513 = vmatpush1.msra.mxu0 %v1466
    %1514 = vmatprep.subr.mxu0 0.0
    %1515 = vmatpush1.msra.mxu0 %v1467
    %1516 = vmatprep.subr.mxu0 0.0
    %1517 = vmatpush1.msra.mxu0 %v1468
    %1518 = vmatprep.subr.mxu0 0.0
    %1519 = vmatpush1.msra.mxu0 %v1469
    %1520 = vmatprep.subr.mxu0 0.0
    %1521 = vmatpush1.msra.mxu0 %v1470
    %1522 = vmatprep.subr.mxu0 0.0
    %1523 = vmatpush1.msra.mxu0 %v1471
    %1524 = vmatprep.subr.mxu0 0.0
    %1525 = vmatpush1.msra.mxu0 %v1472
    %1526 = vmatprep.subr.mxu0 0.0
    %1527 = vmatpush1.msra.mxu0 %v1473
    %1528 = vmatprep.subr.mxu0 0.0
    %1529 = vmatpush1.msra.mxu0 %v1474
    %1530 = vmatprep.subr.mxu0 0.0
    %1531 = vmatpush1.msra.mxu0 %v1475
    %1532 = vmatprep.subr.mxu0 0.0
    %1533 = vmatpush1.msra.mxu0 %v1476
    %1534 = vmatprep.subr.mxu0 0.0
    %1535 = vmatpush1.msra.mxu0 %v1477
    %1536 = vmatprep.subr.mxu0 0.0
    %1537 = vmatpush1.msra.mxu0 %v1478
    %1538 = vmatprep.subr.mxu0 0.0
    %1539 = vmatpush1.msra.mxu0 %v1479
    %1540 = vmatprep.subr.mxu0 0.0
    %1541 = vmatpush1.msra.mxu0 %v1480
    %1542 = vmatprep.subr.mxu0 0.0
    %1543 = vmatpush1.msra.mxu0 %v1481
    %1544 = vmatprep.subr.mxu0 0.0
    %1545 = vmatpush1.msra.mxu0 %v1482
    %1546 = vmatprep.subr.mxu0 0.0
    %1547 = vmatpush1.msra.mxu0 %v1483
    %1548 = vmatprep.subr.mxu0 0.0
    %1549 = vmatpush1.msra.mxu0 %v1484
    %1550 = vmatprep.mubr.f32.mxu0 %v1053
    %1551 = vmatmul.mubr.f32.gmra.mrb[0].mxu0 %v1450
    %v1552 = vpop.f32.mrb[0].mxu0
    %v1553 = vadd.f32 %v1485, %v1552
    %v1554 = vpop.f32.mrb[0].mxu0
    %1555 = vdwg.mxu0
    %1556 = vst [vmem:[%s4] sm:$0xff] %v1380
    %1557 = vst [vmem:[%s4 + $0x8] sm:$0xff] %v1553
    // Predicated region
    $region22: #{forward.1} parent=1 // pred_check
      _
    $region23: #{forward.1} parent=1 // pred_check_branch
      %1559 = sbr.rel (0) target = $region25
    $region24: #{forward.1} parent=1 // pred_region
      _
    $region25: #{forward.1} parent=1 // pred_fallthru
      _
    // Predicated region
    $region26: #{forward.1} parent=1 // pred_check
      _
    $region27: #{forward.1} parent=1 // pred_check_branch
      %1561 = sbr.rel (0) target = $region29
    $region28: #{forward.1} parent=1 // pred_region
      _
    $region29: #{forward.1} parent=1 // pred_fallthru
      _
    %1562 = vsyncpa [#allocation3], 1

</llo_original>
